<compile_context>
chip_gen: v7x
topology: tpu7x:2x2x1
jax: 0.10.0
libtpu: 0.0.40
codegen_flags: <defaults>
</compile_context>

<pallas_src>
import functools
import math

import jax
import jax.numpy as jnp
from jax import lax
from jax.experimental import pallas as pl
from jax.experimental.pallas import tpu as pltpu


# --------------------------- hw / tiling helpers -----------------------------
_VMEM_CAP = None


def _vmem_cap():
    """Physical VMEM per core (bytes); conservative fallback if query fails."""
    global _VMEM_CAP
    if _VMEM_CAP is None:
        try:
            cap = getattr(pltpu.get_tpu_info(), "vmem_capacity_bytes", None)
            _VMEM_CAP = int(cap) if cap else (64 << 20)
        except Exception:  # pragma: no cover - robustness only
            _VMEM_CAP = 64 << 20
    return _VMEM_CAP


def _defaults():
    """Generation-aware default tile sizes (review: larger tiles on 128 MiB
    parts, smaller weights-path tq on 64 MiB v7x)."""
    if _vmem_cap() >= (100 << 20):          # v5e / v6e (128 MiB VMEM)
        return dict(tm=512, tn=512, tk=512, tq_w=512, tq_flash=512, tkv=1024)
    return dict(tm=256, tn=256, tk=512, tq_w=128, tq_flash=256, tkv=512)  # v7x


def _pick_tile(dim, preferred, *aligns):
    """Largest tile <= preferred that divides `dim` and is a multiple of one of
    `aligns` (tried in order); falls back to the full dimension."""
    if dim <= preferred:
        return dim
    for align in aligns:
        t = (preferred // align) * align
        while t >= align:
            if dim % t == 0:
                return t
            t -= align
    return dim


def _compiler_params(dimension_semantics, vmem_bytes):
    """Scoped-VMEM limit from the actual tile budget + margin, capped at 85% of
    physical VMEM (never clamp at exactly the physical size)."""
    cap = int(0.85 * _vmem_cap())
    limit = min(max(int(vmem_bytes) + (8 << 20), 32 << 20), cap)
    return pltpu.CompilerParams(
        dimension_semantics=dimension_semantics, vmem_limit_bytes=limit
    )


# ------------------------------ Tiled linear ---------------------------------
def _linear_kernel(x_ref, w_ref, b_ref, o_ref, acc_ref):
    @pl.when(pl.program_id(2) == 0)
    def _init():
        acc_ref[...] = jnp.zeros_like(acc_ref)

    acc_ref[...] += jnp.dot(
        x_ref[...], w_ref[...], preferred_element_type=jnp.float32
    )

    @pl.when(pl.program_id(2) == pl.num_programs(2) - 1)
    def _finalize():
        o_ref[...] = (
            acc_ref[...] + b_ref[...].astype(jnp.float32)
        ).astype(o_ref.dtype)


def linear(x, w, b, *, tm=None, tn=None, tk=None):
    """Tiled, pipelined y = x @ w + b.  x:[M,Din], w:[Din,Dout], b:[Dout]."""
    M, Din = x.shape
    Dout = w.shape[1]
    d = _defaults()
    tm = _pick_tile(M, tm or d["tm"], 128, 8)
    tn = _pick_tile(Dout, tn or d["tn"], 128)
    tk = _pick_tile(Din, tk or d["tk"], 128)
    it = x.dtype.itemsize
    vmem = 2 * ((tm * tk + tk * tn + tn) * it + tm * tn * it) + tm * tn * 4
    return pl.pallas_call(
        _linear_kernel,
        out_shape=jax.ShapeDtypeStruct((M, Dout), x.dtype),
        grid=(M // tm, Dout // tn, Din // tk),
        in_specs=[
            pl.BlockSpec((tm, tk), lambda i, j, k: (i, k)),
            pl.BlockSpec((tk, tn), lambda i, j, k: (k, j)),
            pl.BlockSpec((1, tn), lambda i, j, k: (0, j)),
        ],
        out_specs=pl.BlockSpec((tm, tn), lambda i, j, k: (i, j)),
        scratch_shapes=[pltpu.VMEM((tm, tn), jnp.float32)],
        compiler_params=_compiler_params(
            ("parallel", "parallel", "arbitrary"), vmem
        ),
    )(x, w, b.reshape(1, Dout))


# ---------------------- Fused QKV projection (3 outputs) ---------------------
def _qkv_linear_kernel(x_ref, w_ref, b_ref, oq_ref, ok_ref, ov_ref, acc_ref,
                       *, d_model, kv_dim):
    @pl.when(pl.program_id(1) == 0)
    def _init():
        acc_ref[...] = jnp.zeros_like(acc_ref)

    acc_ref[...] += jnp.dot(
        x_ref[...], w_ref[...], preferred_element_type=jnp.float32
    )

    @pl.when(pl.program_id(1) == pl.num_programs(1) - 1)
    def _finalize():
        y = acc_ref[...] + b_ref[...].astype(jnp.float32)
        # Split the accumulator by columns straight into the three outputs ->
        # no packed-qkv HBM array and no wrapper-side slicing copies.
        oq_ref[...] = y[:, :d_model].astype(oq_ref.dtype)
        ok_ref[...] = y[:, d_model:d_model + kv_dim].astype(ok_ref.dtype)
        ov_ref[...] = y[:, d_model + kv_dim:].astype(ov_ref.dtype)


def qkv_projection(x, w_qkv, b_qkv, *, d_model, kv_dim, tm=None, tk=None):
    """Fused q/k/v projection: x is read once, one pipelined GEMM over the
    packed weight, q/k/v written directly as three separate outputs."""
    M, Din = x.shape
    Ntot = w_qkv.shape[1]            # d_model + 2 * kv_dim
    d = _defaults()
    tm = _pick_tile(M, tm or d["tm"], 128, 8)
    tk = _pick_tile(Din, tk or d["tk"], 128)
    it = x.dtype.itemsize
    vmem = (2 * (tm * tk + tk * Ntot + Ntot) * it
            + 2 * tm * Ntot * it + tm * Ntot * 4)
    kernel = functools.partial(_qkv_linear_kernel, d_model=d_model, kv_dim=kv_dim)
    return pl.pallas_call(
        kernel,
        out_shape=(
            jax.ShapeDtypeStruct((M, d_model), x.dtype),
            jax.ShapeDtypeStruct((M, kv_dim), x.dtype),
            jax.ShapeDtypeStruct((M, kv_dim), x.dtype),
        ),
        grid=(M // tm, Din // tk),
        in_specs=[
            pl.BlockSpec((tm, tk), lambda i, k: (i, k)),
            pl.BlockSpec((tk, Ntot), lambda i, k: (k, 0)),
            pl.BlockSpec((1, Ntot), lambda i, k: (0, 0)),
        ],
        out_specs=(
            pl.BlockSpec((tm, d_model), lambda i, k: (i, 0)),
            pl.BlockSpec((tm, kv_dim), lambda i, k: (i, 0)),
            pl.BlockSpec((tm, kv_dim), lambda i, k: (i, 0)),
        ),
        scratch_shapes=[pltpu.VMEM((tm, Ntot), jnp.float32)],
        compiler_params=_compiler_params(("parallel", "arbitrary"), vmem),
    )(x, w_qkv, b_qkv.reshape(1, Ntot))


# ------------------ Attention (returns full softmax weights) -----------------
def _gqa_attn_weights_kernel(q_ref, k_ref, v_ref, o_ref, w_ref, *,
                             num_kv_heads, kv_groups, head_dim, scale):
    # q_ref: [tq, D]   (D = num_heads * head_dim, activation layout)
    # k_ref, v_ref: [Skv, kv_dim]   (kv_dim = num_kv_heads * head_dim)
    # o_ref: [tq, D];  w_ref: [num_heads, tq, Skv]
    tq = q_ref.shape[0]
    for g in range(num_kv_heads):
        ks = slice(g * head_dim, (g + 1) * head_dim)
        kg = k_ref[:, ks]                                    # [Skv, hd]
        vg = v_ref[:, ks]
        # Stack the group's kv_groups query heads along rows (head-major) so
        # QK^T and PV are ONE MXU matmul per group; the shared K/V slab is
        # pushed to the MXU once per group instead of once per head.
        qg = jnp.concatenate(
            [q_ref[:, (g * kv_groups + hl) * head_dim:
                      (g * kv_groups + hl + 1) * head_dim]
             for hl in range(kv_groups)], axis=0) * scale    # [G*tq, hd]
        s = lax.dot_general(
            qg, kg, (((1,), (1,)), ((), ())),
            preferred_element_type=jnp.float32,
        )                                                    # [G*tq, Skv]
        # Softmax in f32; EXACT normalisation because these weights are
        # returned to the caller (matches torch softmax).
        m = jnp.max(s, axis=-1, keepdims=True)
        p = jnp.exp(s - m)
        w = p / jnp.sum(p, axis=-1, keepdims=True)
        o = jnp.dot(w.astype(vg.dtype), vg,
                    preferred_element_type=jnp.float32)      # [G*tq, hd]
        for hl in range(kv_groups):
            h = g * kv_groups + hl
            rows = slice(hl * tq, (hl + 1) * tq)
            w_ref[h] = w[rows].astype(w_ref.dtype)           # dense [tq,Skv]
            # head_dim-wide store; dense vst whenever head_dim >= 128.
            o_ref[:, h * head_dim:(h + 1) * head_dim] = o[rows].astype(o_ref.dtype)


def gqa_attention_with_weights(q, k, v, *, num_heads, num_kv_heads, scale,
                               weights_dtype=jnp.float32, tq=None):
    """q:[B,Sq,D], k/v:[B,Skv,kv_dim] -> (out [B,Sq,D], weights [B,H,Sq,Skv])."""
    B, Sq, D = q.shape
    _, Skv, kv_dim = k.shape
    head_dim = D // num_heads
    kv_groups = num_heads // num_kv_heads
    tq = _pick_tile(Sq, tq or _defaults()["tq_w"], 128, 8)
    it = q.dtype.itemsize
    wit = jnp.dtype(weights_dtype).itemsize
    vmem = (2 * (2 * tq * D * it + num_heads * tq * Skv * wit)
            + 2 * Skv * kv_dim * it)                 # K/V single-buffered
    kernel = functools.partial(
        _gqa_attn_weights_kernel, num_kv_heads=num_kv_heads,
        kv_groups=kv_groups, head_dim=head_dim, scale=scale,
    )
    # K/V index maps are constant over the q-tile axis -> single-buffer them.
    kv_spec = lambda: pl.BlockSpec((None, Skv, kv_dim), lambda b, t: (b, 0, 0),
                                   pipeline_mode=pl.Buffered(1))
    return pl.pallas_call(
        kernel,
        out_shape=(
            jax.ShapeDtypeStruct((B, Sq, D), q.dtype),
            jax.ShapeDtypeStruct((B, num_heads, Sq, Skv), weights_dtype),
        ),
        grid=(B, Sq // tq),
        in_specs=[
            pl.BlockSpec((None, tq, D), lambda b, t: (b, t, 0)),
            kv_spec(),
            kv_spec(),
        ],
        out_specs=(
            pl.BlockSpec((None, tq, D), lambda b, t: (b, t, 0)),
            pl.BlockSpec((None, num_heads, tq, Skv), lambda b, t: (b, 0, t, 0)),
        ),
        compiler_params=_compiler_params(("parallel", "parallel"), vmem),
    )(q, k, v)


# ---------------- Attention (no weights, KV-tiled online softmax) ------------
def _gqa_attn_flash_kernel(q_ref, k_ref, v_ref, o_ref,
                           qs_ref, m_ref, l_ref, acc_ref, *,
                           num_kv_heads, kv_groups, head_dim, scale):
    # qs_ref : [num_kv_heads, G*tq, hd]  pre-scaled, group-stacked q
    # m_ref/l_ref : [num_kv_heads, G*tq, 1] ; acc_ref : [num_kv_heads, G*tq, hd]
    tq = q_ref.shape[0]
    kt = pl.program_id(2)

    @pl.when(kt == 0)
    def _init():
        m_ref[...] = jnp.full(m_ref.shape, -1e30, dtype=m_ref.dtype)
        l_ref[...] = jnp.zeros_like(l_ref)
        acc_ref[...] = jnp.zeros_like(acc_ref)
        # Pre-scale q and stack each group's heads ONCE per query tile
        # (not per KV step / per head).
        for g in range(num_kv_heads):
            qg = jnp.concatenate(
                [q_ref[:, (g * kv_groups + hl) * head_dim:
                          (g * kv_groups + hl + 1) * head_dim]
                 for hl in range(kv_groups)], axis=0)
            qs_ref[g] = (qg * scale).astype(qs_ref.dtype)

    for g in range(num_kv_heads):
        ks = slice(g * head_dim, (g + 1) * head_dim)
        kg = k_ref[:, ks]                                   # [tkv, hd]
        vg = v_ref[:, ks]
        s = lax.dot_general(
            qs_ref[g], kg, (((1,), (1,)), ((), ())),
            preferred_element_type=jnp.float32,
        )                                                   # [G*tq, tkv]
        m_prev = m_ref[g]                                   # [G*tq, 1]
        m_new = jnp.maximum(m_prev, jnp.max(s, axis=-1, keepdims=True))
        alpha = jnp.exp(m_prev - m_new)
        p = jnp.exp(s - m_new)
        # All state updates are dense whole-block stores (no masked 1-lane or
        # sub-128-lane column writes).
        l_ref[g] = alpha * l_ref[g] + jnp.sum(p, axis=-1, keepdims=True)
        acc_ref[g] = alpha * acc_ref[g] + jnp.dot(
            p.astype(vg.dtype), vg, preferred_element_type=jnp.float32
        )
        m_ref[g] = m_new

    @pl.when(kt == pl.num_programs(2) - 1)
    def _finalize():
        for g in range(num_kv_heads):
            inv = pl.reciprocal(l_ref[g], approx=True)      # EUP slot
            og = acc_ref[g] * inv                           # [G*tq, hd]
            for hl in range(kv_groups):
                h = g * kv_groups + hl
                o_ref[:, h * head_dim:(h + 1) * head_dim] = (
                    og[hl * tq:(hl + 1) * tq].astype(o_ref.dtype))


def gqa_attention_flash(q, k, v, *, num_heads, num_kv_heads, scale,
                        tq=None, tkv=None):
    """Like gqa_attention_with_weights but without materializing the weights;
    the KV axis is tiled ('arbitrary') with group-major online-softmax state."""
    B, Sq, D = q.shape
    _, Skv, kv_dim = k.shape
    head_dim = D // num_heads
    kv_groups = num_heads // num_kv_heads
    d = _defaults()
    tq = _pick_tile(Sq, tq or d["tq_flash"], 128, 8)
    tkv = _pick_tile(Skv, tkv or d["tkv"], 128, 8)
    it = q.dtype.itemsize
    vmem = (2 * (2 * tq * D * it + 2 * tkv * kv_dim * it)
            + tq * D * it + tq * D * 4 + 2 * num_heads * tq * 128 * 4)
    kernel = functools.partial(
        _gqa_attn_flash_kernel, num_kv_heads=num_kv_heads,
        kv_groups=kv_groups, head_dim=head_dim, scale=scale,
    )
    return pl.pallas_call(
        kernel,
        out_shape=jax.ShapeDtypeStruct((B, Sq, D), q.dtype),
        grid=(B, Sq // tq, Skv // tkv),
        in_specs=[
            pl.BlockSpec((None, tq, D), lambda b, t, kt: (b, t, 0)),
            pl.BlockSpec((None, tkv, kv_dim), lambda b, t, kt: (b, kt, 0)),
            pl.BlockSpec((None, tkv, kv_dim), lambda b, t, kt: (b, kt, 0)),
        ],
        out_specs=pl.BlockSpec((None, tq, D), lambda b, t, kt: (b, t, 0)),
        scratch_shapes=[
            pltpu.VMEM((num_kv_heads, kv_groups * tq, head_dim), q.dtype),
            pltpu.VMEM((num_kv_heads, kv_groups * tq, 1), jnp.float32),
            pltpu.VMEM((num_kv_heads, kv_groups * tq, 1), jnp.float32),
            pltpu.VMEM((num_kv_heads, kv_groups * tq, head_dim), jnp.float32),
        ],
        compiler_params=_compiler_params(
            ("parallel", "parallel", "arbitrary"), vmem
        ),
    )(q, k, v)


# ------------------------------ Full module ----------------------------------
def gqa_forward(params, q_in, k_in=None, v_in=None, attn_mask=None, *,
                num_query_heads, num_kv_heads, return_weights=True,
                weights_dtype=jnp.float32):
    # TODO(synk): attn_mask masking and training-mode dropout not implemented.
    assert attn_mask is None, "attn_mask is not supported by this kernel"
    if k_in is None:
        k_in = q_in
    if v_in is None:
        v_in = k_in
    fuse_qkv = (k_in is q_in) and (v_in is q_in)

    B, Sq, D = q_in.shape
    _, Skv, _ = k_in.shape
    assert D % num_query_heads == 0 and num_query_heads % num_kv_heads == 0
    hd = D // num_query_heads
    kv_dim = num_kv_heads * hd
    scale = hd ** (-0.5)

    if fuse_qkv:
        # Fused weights are pre-packed ONCE at init (no per-call concat in HBM).
        w_qkv = params.get("w_qkv")
        b_qkv = params.get("b_qkv")
        if w_qkv is None:
            w_qkv = jnp.concatenate([params["wq"], params["wk"], params["wv"]], axis=1)
            b_qkv = jnp.concatenate([params["bq"], params["bk"], params["bv"]])
        q2, k2, v2 = qkv_projection(
            q_in.reshape(B * Sq, D), w_qkv, b_qkv, d_model=D, kv_dim=kv_dim
        )
        q = q2.reshape(B, Sq, D)
        k = k2.reshape(B, Skv, kv_dim)
        v = v2.reshape(B, Skv, kv_dim)
    else:
        q = linear(q_in.reshape(B * Sq, D), params["wq"], params["bq"]).reshape(B, Sq, D)
        k = linear(k_in.reshape(B * Skv, D), params["wk"], params["bk"]).reshape(B, Skv, kv_dim)
        v = linear(v_in.reshape(B * Skv, D), params["wv"], params["bv"]).reshape(B, Skv, kv_dim)

    if return_weights:
        out, attn = gqa_attention_with_weights(
            q, k, v, num_heads=num_query_heads, num_kv_heads=num_kv_heads,
            scale=scale, weights_dtype=weights_dtype,
        )
    else:
        out = gqa_attention_flash(
            q, k, v, num_heads=num_query_heads, num_kv_heads=num_kv_heads,
            scale=scale,
        )
        attn = None

    # Attention output is already in [B, Sq, D] head-merged layout -> o_proj.
    out = linear(out.reshape(B * Sq, D), params["wo"], params["bo"]).reshape(B, Sq, D)
    return out, attn


# ------------------------------ Param init -----------------------------------
def xavier_uniform(key, fan_in, fan_out, gain):
    bound = gain * math.sqrt(6.0 / (fan_in + fan_out))
    # stored transposed relative to torch: [fan_in, fan_out]
    return jax.random.uniform(
        key, (fan_in, fan_out), jnp.float32, minval=-bound, maxval=bound
    )


def init_params(key, d_model, num_query_heads, num_kv_heads):
    hd = d_model // num_query_heads
    kv_dim = num_kv_heads * hd
    gain = 1.0 / math.sqrt(2.0)
    kq, kk, kv, ko = jax.random.split(key, 4)
    p = {
        "wq": xavier_uniform(kq, d_model, d_model, gain),
        "bq": jnp.zeros((d_model,), jnp.float32),
        "wk": xavier_uniform(kk, d_model, kv_dim, gain),
        "bk": jnp.zeros((kv_dim,), jnp.float32),
        "wv": xavier_uniform(kv, d_model, kv_dim, gain),
        "bv": jnp.zeros((kv_dim,), jnp.float32),
        "wo": xavier_uniform(ko, d_model, d_model, gain),
        "bo": jnp.zeros((d_model,), jnp.float32),
    }
    # Pre-pack fused QKV weights once (used by the fused self-attention path).
    p["w_qkv"] = jnp.concatenate([p["wq"], p["wk"], p["wv"]], axis=1)
    p["b_qkv"] = jnp.concatenate([p["bq"], p["bk"], p["bv"]])
    return p


# ------------------------------ Reference ------------------------------------
def gqa_reference(params, x, *, num_query_heads, num_kv_heads):
    B, S, D = x.shape
    hd = D // num_query_heads
    groups = num_query_heads // num_kv_heads
    q = (x.reshape(B * S, D) @ params["wq"] + params["bq"]).reshape(B, S, num_query_heads, hd)
    k = (x.reshape(B * S, D) @ params["wk"] + params["bk"]).reshape(B, S, num_kv_heads, hd)
    v = (x.reshape(B * S, D) @ params["wv"] + params["bv"]).reshape(B, S, num_kv_heads, hd)
    k = jnp.repeat(k, groups, axis=2)
    v = jnp.repeat(v, groups, axis=2)
    q, k, v = (t.transpose(0, 2, 1, 3) for t in (q, k, v))
    s = jnp.einsum("bhqd,bhkd->bhqk", q, k) * (hd ** -0.5)
    w = jax.nn.softmax(s, axis=-1)
    o = jnp.einsum("bhqk,bhkd->bhqd", w, v)
    o = o.transpose(0, 2, 1, 3).reshape(B, S, D)
    o = o.reshape(B * S, D) @ params["wo"] + params["bo"]
    return o.reshape(B, S, D), w


# --------------------------------- Main ---------------------------------------
if __name__ == "__main__":
    d_model = 32
    num_query_heads = 8
    num_kv_heads = 2
    batch = 2
    seq = 8

    key = jax.random.PRNGKey(0)
    kp, kx = jax.random.split(key)
    params = init_params(kp, d_model, num_query_heads, num_kv_heads)
    x = jax.random.normal(kx, (batch, seq, d_model), jnp.float32)

    fwd = jax.jit(functools.partial(
        gqa_forward, num_query_heads=num_query_heads,
        num_kv_heads=num_kv_heads, return_weights=True))
    fwd_nw = jax.jit(functools.partial(
        gqa_forward, num_query_heads=num_query_heads,
        num_kv_heads=num_kv_heads, return_weights=False))

    ref_out, ref_attn = gqa_reference(
        params, x, num_query_heads=num_query_heads, num_kv_heads=num_kv_heads
    )

    # Path 1: full module semantics (returns attention weights, exact softmax).
    out, attn = fwd(params, x)
    out = jax.block_until_ready(out)
    attn = jax.block_until_ready(attn)
    assert out.shape == (batch, seq, d_model)
    assert attn.shape == (batch, num_query_heads, seq, seq)
    assert jnp.allclose(out, ref_out, atol=2e-3, rtol=2e-3)
    assert jnp.allclose(attn, ref_attn, atol=2e-3, rtol=2e-3)

    # Path 2: flash-style (no weights materialized, KV-tiled online softmax).
    out_nw, attn_nw = fwd_nw(params, x)
    out_nw = jax.block_until_ready(out_nw)
    assert attn_nw is None
    assert jnp.allclose(out_nw, ref_out, atol=5e-3, rtol=5e-3)

    # Path 3: bf16 MXU operands (softmax math stays f32 inside the kernels).
    params_bf16 = jax.tree_util.tree_map(lambda a: a.astype(jnp.bfloat16), params)
    x_bf16 = x.astype(jnp.bfloat16)
    out_bf16, _ = fwd(params_bf16, x_bf16)
    out_bf16 = jax.block_until_ready(out_bf16)
    assert jnp.allclose(out_bf16.astype(jnp.float32), ref_out, atol=1e-1, rtol=1e-1)

    print("KERNEL_OK")
</pallas_src>

<mosaic_0001>
module attributes {stable_mosaic.version = 11 : i64} {
  func.func @_linear_kernel(%arg0: i32, %arg1: i32, %arg2: i32, %arg3: memref<16x32xf32, #tpu.memory_space<vmem>>, %arg4: memref<32x32xf32, #tpu.memory_space<vmem>>, %arg5: memref<1x32xf32, #tpu.memory_space<vmem>>, %arg6: memref<16x32xf32, #tpu.memory_space<vmem>>, %arg7: memref<16x32xf32, #tpu.memory_space<vmem>>) attributes {dimension_semantics = [#tpu.dimension_semantics<parallel>, #tpu.dimension_semantics<parallel>, #tpu.dimension_semantics<arbitrary>], iteration_bounds = array<i64: 1, 1, 1>, scalar_prefetch = 0 : i64, scratch_operands = 1 : i64, tpu.core_type = #tpu.core_type<tc>, window_params = [{transform_indices = @transform_0, window_bounds = array<i64: 16, 32>}, {transform_indices = @transform_1, window_bounds = array<i64: 32, 32>}, {transform_indices = @transform_2, window_bounds = array<i64: 1, 32>}, {transform_indices = @transform_3, window_bounds = array<i64: 16, 32>}]} {
    %c0_i32 = arith.constant 0 : i32
    %0 = arith.cmpi eq, %arg2, %c0_i32 : i32
    %1 = arith.extui %0 : i1 to i32
    %c0_i32_0 = arith.constant 0 : i32
    %2 = arith.cmpi ne, %1, %c0_i32_0 : i32
    scf.if %2 {
      %cst_10 = arith.constant 0.000000e+00 : f32
      %12 = vector.broadcast %cst_10 : f32 to vector<16x32xf32>
      %c0_11 = arith.constant 0 : index
      %c0_12 = arith.constant 0 : index
      %13 = vector.load %arg7[%c0_11, %c0_12] : memref<16x32xf32, #tpu.memory_space<vmem>>, vector<16x32xf32>
      tpu.vector_store %arg7[%c0_11, %c0_12], %12 {strides = array<i32>} : memref<16x32xf32, #tpu.memory_space<vmem>>, vector<16x32xf32>,
    } else {
    }
    %c0 = arith.constant 0 : index
    %c0_1 = arith.constant 0 : index
    %3 = vector.load %arg7[%c0, %c0_1] : memref<16x32xf32, #tpu.memory_space<vmem>>, vector<16x32xf32>
    %c0_2 = arith.constant 0 : index
    %c0_3 = arith.constant 0 : index
    %4 = vector.load %arg3[%c0_2, %c0_3] : memref<16x32xf32, #tpu.memory_space<vmem>>, vector<16x32xf32>
    %c0_4 = arith.constant 0 : index
    %c0_5 = arith.constant 0 : index
    %5 = vector.load %arg4[%c0_4, %c0_5] : memref<32x32xf32, #tpu.memory_space<vmem>>, vector<32x32xf32>
    %cst = arith.constant dense<0.000000e+00> : vector<16x32xf32>
    %6 = tpu.matmul %4, %5, %cst {dimension_numbers = #tpu.dot_dimension_numbers<[1], [0], [0], [1], [0, 0, 1, 1], [], []>} : vector<16x32xf32>, vector<32x32xf32>, vector<16x32xf32> -> vector<16x32xf32>
    %7 = arith.addf %3, %6 : vector<16x32xf32>
    %c0_6 = arith.constant 0 : index
    %c0_7 = arith.constant 0 : index
    %8 = vector.load %arg7[%c0_6, %c0_7] : memref<16x32xf32, #tpu.memory_space<vmem>>, vector<16x32xf32>
    tpu.vector_store %arg7[%c0_6, %c0_7], %7 {strides = array<i32>} : memref<16x32xf32, #tpu.memory_space<vmem>>, vector<16x32xf32>,
    %c0_i32_8 = arith.constant 0 : i32
    %9 = arith.cmpi eq, %arg2, %c0_i32_8 : i32
    %10 = arith.extui %9 : i1 to i32
    %c0_i32_9 = arith.constant 0 : i32
    %11 = arith.cmpi ne, %10, %c0_i32_9 : i32
    scf.if %11 {
      %c0_10 = arith.constant 0 : index
      %c0_11 = arith.constant 0 : index
      %12 = vector.load %arg7[%c0_10, %c0_11] : memref<16x32xf32, #tpu.memory_space<vmem>>, vector<16x32xf32>
      %c0_12 = arith.constant 0 : index
      %c0_13 = arith.constant 0 : index
      %13 = vector.load %arg5[%c0_12, %c0_13] : memref<1x32xf32, #tpu.memory_space<vmem>>, vector<1x32xf32>
      %14 = vector.broadcast %13 : vector<1x32xf32> to vector<16x32xf32>
      %15 = arith.addf %12, %14 : vector<16x32xf32>
      %c0_14 = arith.constant 0 : index
      %c0_15 = arith.constant 0 : index
      %16 = vector.load %arg6[%c0_14, %c0_15] : memref<16x32xf32, #tpu.memory_space<vmem>>, vector<16x32xf32>
      tpu.vector_store %arg6[%c0_14, %c0_15], %15 {strides = array<i32>} : memref<16x32xf32, #tpu.memory_space<vmem>>, vector<16x32xf32>,
    } else {
    }
    return
  }
  func.func @transform_0(%arg0: i32, %arg1: i32, %arg2: i32) -> (i32, i32) {
    %c0_i32 = arith.constant 0 : i32
    return %arg0, %arg2 : i32, i32
  }
  func.func @transform_1(%arg0: i32, %arg1: i32, %arg2: i32) -> (i32, i32) {
    %c0_i32 = arith.constant 0 : i32
    return %arg2, %arg1 : i32, i32
  }
  func.func @transform_2(%arg0: i32, %arg1: i32, %arg2: i32) -> (i32, i32) {
    %c0_i32 = arith.constant 0 : i32
    %c0_i32_0 = arith.constant 0 : i32
    return %c0_i32, %arg1 : i32, i32
  }
  func.func @transform_3(%arg0: i32, %arg1: i32, %arg2: i32) -> (i32, i32) {
    %c0_i32 = arith.constant 0 : i32
    return %arg0, %arg1 : i32, i32
  }
}

module attributes {stable_mosaic.version = 11 : i64} {
  func.func @_gqa_attn_weights_kernel(%arg0: i32, %arg1: i32, %arg2: memref<1x8x32xf32, #tpu.memory_space<vmem>>, %arg3: memref<1x8x8xf32, #tpu.memory_space<vmem>>, %arg4: memref<1x8x8xf32, #tpu.memory_space<vmem>>, %arg5: memref<1x8x32xf32, #tpu.memory_space<vmem>>, %arg6: memref<1x8x8x8xf32, #tpu.memory_space<vmem>>) attributes {dimension_semantics = [#tpu.dimension_semantics<parallel>, #tpu.dimension_semantics<parallel>], iteration_bounds = array<i64: 2, 1>, scalar_prefetch = 0 : i64, scratch_operands = 0 : i64, tpu.core_type = #tpu.core_type<tc>, window_params = [{transform_indices = @transform_0, window_bounds = array<i64: 1, 8, 32>}, {pipeline_mode = #tpu.pipeline_mode<synchronous>, transform_indices = @transform_1, window_bounds = array<i64: 1, 8, 8>}, {pipeline_mode = #tpu.pipeline_mode<synchronous>, transform_indices = @transform_2, window_bounds = array<i64: 1, 8, 8>}, {transform_indices = @transform_3, window_bounds = array<i64: 1, 8, 32>}, {transform_indices = @transform_4, window_bounds = array<i64: 1, 8, 8, 8>}]} {
    %c0 = arith.constant 0 : index
    %c0_0 = arith.constant 0 : index
    %c0_1 = arith.constant 0 : index
    %0 = vector.load %arg3[%c0, %c0_0, %c0_1] : memref<1x8x8xf32, #tpu.memory_space<vmem>>, vector<1x8x4xf32>
    %1 = vector.shape_cast %0 : vector<1x8x4xf32> to vector<8x4xf32>
    %c0_2 = arith.constant 0 : index
    %c0_3 = arith.constant 0 : index
    %c0_4 = arith.constant 0 : index
    %2 = vector.load %arg4[%c0_2, %c0_3, %c0_4] : memref<1x8x8xf32, #tpu.memory_space<vmem>>, vector<1x8x4xf32>
    %3 = vector.shape_cast %2 : vector<1x8x4xf32> to vector<8x4xf32>
    %c0_5 = arith.constant 0 : index
    %c0_6 = arith.constant 0 : index
    %c0_7 = arith.constant 0 : index
    %4 = vector.load %arg2[%c0_5, %c0_6, %c0_7] : memref<1x8x32xf32, #tpu.memory_space<vmem>>, vector<1x8x4xf32>
    %5 = vector.shape_cast %4 : vector<1x8x4xf32> to vector<8x4xf32>
    %c0_8 = arith.constant 0 : index
    %c0_9 = arith.constant 0 : index
    %c4 = arith.constant 4 : index
    %6 = vector.load %arg2[%c0_8, %c0_9, %c4] : memref<1x8x32xf32, #tpu.memory_space<vmem>>, vector<1x8x4xf32>
    %7 = vector.shape_cast %6 : vector<1x8x4xf32> to vector<8x4xf32>
    %c0_10 = arith.constant 0 : index
    %c0_11 = arith.constant 0 : index
    %c8 = arith.constant 8 : index
    %8 = vector.load %arg2[%c0_10, %c0_11, %c8] : memref<1x8x32xf32, #tpu.memory_space<vmem>>, vector<1x8x4xf32>
    %9 = vector.shape_cast %8 : vector<1x8x4xf32> to vector<8x4xf32>
    %c0_12 = arith.constant 0 : index
    %c0_13 = arith.constant 0 : index
    %c12 = arith.constant 12 : index
    %10 = vector.load %arg2[%c0_12, %c0_13, %c12] : memref<1x8x32xf32, #tpu.memory_space<vmem>>, vector<1x8x4xf32>
    %11 = vector.shape_cast %10 : vector<1x8x4xf32> to vector<8x4xf32>
    %12 = tpu.concatenate %5, %7, %9, %11 in 0 : vector<8x4xf32>, vector<8x4xf32>, vector<8x4xf32>, vector<8x4xf32> -> vector<32x4xf32>
    %cst = arith.constant 5.000000e-01 : f32
    %13 = vector.broadcast %cst : f32 to vector<32x4xf32>
    %14 = arith.mulf %12, %13 : vector<32x4xf32>
    %cst_14 = arith.constant dense<0.000000e+00> : vector<32x8xf32>
    %15 = tpu.matmul %14, %1, %cst_14 {dimension_numbers = #tpu.dot_dimension_numbers<[1], [1], [0], [0], [0, 0, 1, 0], [], []>} : vector<32x4xf32>, vector<8x4xf32>, vector<32x8xf32> -> vector<32x8xf32>
    %cst_15 = arith.constant dense<0xFF800000> : vector<32xf32>
    %16 = vector.multi_reduction <maximumf>, %15, %cst_15 [1] : vector<32x8xf32> to vector<32xf32>
    %17 = vector.shape_cast %16 : vector<32xf32> to vector<32x1xf32>
    %18 = vector.broadcast %17 : vector<32x1xf32> to vector<32x8xf32>
    %19 = arith.subf %15, %18 : vector<32x8xf32>
    %20 = math.exp %19 : vector<32x8xf32>
    %cst_16 = arith.constant dense<0.000000e+00> : vector<32xf32>
    %21 = vector.multi_reduction <add>, %20, %cst_16 [1] : vector<32x8xf32> to vector<32xf32>
    %22 = vector.shape_cast %21 : vector<32xf32> to vector<32x1xf32>
    %23 = vector.broadcast %22 : vector<32x1xf32> to vector<32x8xf32>
    %24 = arith.divf %20, %23 : vector<32x8xf32>
    %cst_17 = arith.constant dense<0.000000e+00> : vector<32x4xf32>
    %25 = tpu.matmul %24, %3, %cst_17 {dimension_numbers = #tpu.dot_dimension_numbers<[1], [0], [0], [1], [0, 0, 1, 1], [], []>} : vector<32x8xf32>, vector<8x4xf32>, vector<32x4xf32> -> vector<32x4xf32>
    %26 = vector.extract_strided_slice %24 {offsets = [0, 0], sizes = [8, 8], strides = [1, 1]} : vector<32x8xf32> to vector<8x8xf32>
    %c0_18 = arith.constant 0 : index
    %c0_19 = arith.constant 0 : index
    %c0_20 = arith.constant 0 : index
    %c0_21 = arith.constant 0 : index
    %27 = vector.load %arg6[%c0_18, %c0_19, %c0_20, %c0_21] : memref<1x8x8x8xf32, #tpu.memory_space<vmem>>, vector<1x1x8x8xf32>
    %28 = vector.shape_cast %27 : vector<1x1x8x8xf32> to vector<8x8xf32>
    %29 = vector.shape_cast %26 : vector<8x8xf32> to vector<1x1x8x8xf32>
    tpu.vector_store %arg6[%c0_18, %c0_19, %c0_20, %c0_21], %29 {strides = array<i32>} : memref<1x8x8x8xf32, #tpu.memory_space<vmem>>, vector<1x1x8x8xf32>,
    %30 = vector.extract_strided_slice %25 {offsets = [0, 0], sizes = [8, 4], strides = [1, 1]} : vector<32x4xf32> to vector<8x4xf32>
    %c0_22 = arith.constant 0 : index
    %c0_23 = arith.constant 0 : index
    %c0_24 = arith.constant 0 : index
    %31 = vector.load %arg5[%c0_22, %c0_23, %c0_24] : memref<1x8x32xf32, #tpu.memory_space<vmem>>, vector<1x8x4xf32>
    %32 = vector.shape_cast %31 : vector<1x8x4xf32> to vector<8x4xf32>
    %33 = vector.shape_cast %30 : vector<8x4xf32> to vector<1x8x4xf32>
    tpu.vector_store %arg5[%c0_22, %c0_23, %c0_24], %33 {strides = array<i32>} : memref<1x8x32xf32, #tpu.memory_space<vmem>>, vector<1x8x4xf32>,
    %34 = vector.extract_strided_slice %24 {offsets = [8, 0], sizes = [8, 8], strides = [1, 1]} : vector<32x8xf32> to vector<8x8xf32>
    %c0_25 = arith.constant 0 : index
    %c1 = arith.constant 1 : index
    %c0_26 = arith.constant 0 : index
    %c0_27 = arith.constant 0 : index
    %35 = vector.load %arg6[%c0_25, %c1, %c0_26, %c0_27] : memref<1x8x8x8xf32, #tpu.memory_space<vmem>>, vector<1x1x8x8xf32>
    %36 = vector.shape_cast %35 : vector<1x1x8x8xf32> to vector<8x8xf32>
    %37 = vector.shape_cast %34 : vector<8x8xf32> to vector<1x1x8x8xf32>
    tpu.vector_store %arg6[%c0_25, %c1, %c0_26, %c0_27], %37 {strides = array<i32>} : memref<1x8x8x8xf32, #tpu.memory_space<vmem>>, vector<1x1x8x8xf32>,
    %38 = vector.extract_strided_slice %25 {offsets = [8, 0], sizes = [8, 4], strides = [1, 1]} : vector<32x4xf32> to vector<8x4xf32>
    %c0_28 = arith.constant 0 : index
    %c0_29 = arith.constant 0 : index
    %c4_30 = arith.constant 4 : index
    %39 = vector.load %arg5[%c0_28, %c0_29, %c4_30] : memref<1x8x32xf32, #tpu.memory_space<vmem>>, vector<1x8x4xf32>
    %40 = vector.shape_cast %39 : vector<1x8x4xf32> to vector<8x4xf32>
    %41 = vector.shape_cast %38 : vector<8x4xf32> to vector<1x8x4xf32>
    tpu.vector_store %arg5[%c0_28, %c0_29, %c4_30], %41 {strides = array<i32>} : memref<1x8x32xf32, #tpu.memory_space<vmem>>, vector<1x8x4xf32>,
    %42 = vector.extract_strided_slice %24 {offsets = [16, 0], sizes = [8, 8], strides = [1, 1]} : vector<32x8xf32> to vector<8x8xf32>
    %c0_31 = arith.constant 0 : index
    %c2 = arith.constant 2 : index
    %c0_32 = arith.constant 0 : index
    %c0_33 = arith.constant 0 : index
    %43 = vector.load %arg6[%c0_31, %c2, %c0_32, %c0_33] : memref<1x8x8x8xf32, #tpu.memory_space<vmem>>, vector<1x1x8x8xf32>
    %44 = vector.shape_cast %43 : vector<1x1x8x8xf32> to vector<8x8xf32>
    %45 = vector.shape_cast %42 : vector<8x8xf32> to vector<1x1x8x8xf32>
    tpu.vector_store %arg6[%c0_31, %c2, %c0_32, %c0_33], %45 {strides = array<i32>} : memref<1x8x8x8xf32, #tpu.memory_space<vmem>>, vector<1x1x8x8xf32>,
    %46 = vector.extract_strided_slice %25 {offsets = [16, 0], sizes = [8, 4], strides = [1, 1]} : vector<32x4xf32> to vector<8x4xf32>
    %c0_34 = arith.constant 0 : index
    %c0_35 = arith.constant 0 : index
    %c8_36 = arith.constant 8 : index
    %47 = vector.load %arg5[%c0_34, %c0_35, %c8_36] : memref<1x8x32xf32, #tpu.memory_space<vmem>>, vector<1x8x4xf32>
    %48 = vector.shape_cast %47 : vector<1x8x4xf32> to vector<8x4xf32>
    %49 = vector.shape_cast %46 : vector<8x4xf32> to vector<1x8x4xf32>
    tpu.vector_store %arg5[%c0_34, %c0_35, %c8_36], %49 {strides = array<i32>} : memref<1x8x32xf32, #tpu.memory_space<vmem>>, vector<1x8x4xf32>,
    %50 = vector.extract_strided_slice %24 {offsets = [24, 0], sizes = [8, 8], strides = [1, 1]} : vector<32x8xf32> to vector<8x8xf32>
    %c0_37 = arith.constant 0 : index
    %c3 = arith.constant 3 : index
    %c0_38 = arith.constant 0 : index
    %c0_39 = arith.constant 0 : index
    %51 = vector.load %arg6[%c0_37, %c3, %c0_38, %c0_39] : memref<1x8x8x8xf32, #tpu.memory_space<vmem>>, vector<1x1x8x8xf32>
    %52 = vector.shape_cast %51 : vector<1x1x8x8xf32> to vector<8x8xf32>
    %53 = vector.shape_cast %50 : vector<8x8xf32> to vector<1x1x8x8xf32>
    tpu.vector_store %arg6[%c0_37, %c3, %c0_38, %c0_39], %53 {strides = array<i32>} : memref<1x8x8x8xf32, #tpu.memory_space<vmem>>, vector<1x1x8x8xf32>,
    %54 = vector.extract_strided_slice %25 {offsets = [24, 0], sizes = [8, 4], strides = [1, 1]} : vector<32x4xf32> to vector<8x4xf32>
    %c0_40 = arith.constant 0 : index
    %c0_41 = arith.constant 0 : index
    %c12_42 = arith.constant 12 : index
    %55 = vector.load %arg5[%c0_40, %c0_41, %c12_42] : memref<1x8x32xf32, #tpu.memory_space<vmem>>, vector<1x8x4xf32>
    %56 = vector.shape_cast %55 : vector<1x8x4xf32> to vector<8x4xf32>
    %57 = vector.shape_cast %54 : vector<8x4xf32> to vector<1x8x4xf32>
    tpu.vector_store %arg5[%c0_40, %c0_41, %c12_42], %57 {strides = array<i32>} : memref<1x8x32xf32, #tpu.memory_space<vmem>>, vector<1x8x4xf32>,
    %c0_43 = arith.constant 0 : index
    %c0_44 = arith.constant 0 : index
    %c4_45 = arith.constant 4 : index
    %58 = vector.load %arg3[%c0_43, %c0_44, %c4_45] : memref<1x8x8xf32, #tpu.memory_space<vmem>>, vector<1x8x4xf32>
    %59 = vector.shape_cast %58 : vector<1x8x4xf32> to vector<8x4xf32>
    %c0_46 = arith.constant 0 : index
    %c0_47 = arith.constant 0 : index
    %c4_48 = arith.constant 4 : index
    %60 = vector.load %arg4[%c0_46, %c0_47, %c4_48] : memref<1x8x8xf32, #tpu.memory_space<vmem>>, vector<1x8x4xf32>
    %61 = vector.shape_cast %60 : vector<1x8x4xf32> to vector<8x4xf32>
    %c0_49 = arith.constant 0 : index
    %c0_50 = arith.constant 0 : index
    %c16 = arith.constant 16 : index
    %62 = vector.load %arg2[%c0_49, %c0_50, %c16] : memref<1x8x32xf32, #tpu.memory_space<vmem>>, vector<1x8x4xf32>
    %63 = vector.shape_cast %62 : vector<1x8x4xf32> to vector<8x4xf32>
    %c0_51 = arith.constant 0 : index
    %c0_52 = arith.constant 0 : index
    %c20 = arith.constant 20 : index
    %64 = vector.load %arg2[%c0_51, %c0_52, %c20] : memref<1x8x32xf32, #tpu.memory_space<vmem>>, vector<1x8x4xf32>
    %65 = vector.shape_cast %64 : vector<1x8x4xf32> to vector<8x4xf32>
    %c0_53 = arith.constant 0 : index
    %c0_54 = arith.constant 0 : index
    %c24 = arith.constant 24 : index
    %66 = vector.load %arg2[%c0_53, %c0_54, %c24] : memref<1x8x32xf32, #tpu.memory_space<vmem>>, vector<1x8x4xf32>
    %67 = vector.shape_cast %66 : vector<1x8x4xf32> to vector<8x4xf32>
    %c0_55 = arith.constant 0 : index
    %c0_56 = arith.constant 0 : index
    %c28 = arith.constant 28 : index
    %68 = vector.load %arg2[%c0_55, %c0_56, %c28] : memref<1x8x32xf32, #tpu.memory_space<vmem>>, vector<1x8x4xf32>
    %69 = vector.shape_cast %68 : vector<1x8x4xf32> to vector<8x4xf32>
    %70 = tpu.concatenate %63, %65, %67, %69 in 0 : vector<8x4xf32>, vector<8x4xf32>, vector<8x4xf32>, vector<8x4xf32> -> vector<32x4xf32>
    %cst_57 = arith.constant 5.000000e-01 : f32
    %71 = vector.broadcast %cst_57 : f32 to vector<32x4xf32>
    %72 = arith.mulf %70, %71 : vector<32x4xf32>
    %cst_58 = arith.constant dense<0.000000e+00> : vector<32x8xf32>
    %73 = tpu.matmul %72, %59, %cst_58 {dimension_numbers = #tpu.dot_dimension_numbers<[1], [1], [0], [0], [0, 0, 1, 0], [], []>} : vector<32x4xf32>, vector<8x4xf32>, vector<32x8xf32> -> vector<32x8xf32>
    %cst_59 = arith.constant dense<0xFF800000> : vector<32xf32>
    %74 = vector.multi_reduction <maximumf>, %73, %cst_59 [1] : vector<32x8xf32> to vector<32xf32>
    %75 = vector.shape_cast %74 : vector<32xf32> to vector<32x1xf32>
    %76 = vector.broadcast %75 : vector<32x1xf32> to vector<32x8xf32>
    %77 = arith.subf %73, %76 : vector<32x8xf32>
    %78 = math.exp %77 : vector<32x8xf32>
    %cst_60 = arith.constant dense<0.000000e+00> : vector<32xf32>
    %79 = vector.multi_reduction <add>, %78, %cst_60 [1] : vector<32x8xf32> to vector<32xf32>
    %80 = vector.shape_cast %79 : vector<32xf32> to vector<32x1xf32>
    %81 = vector.broadcast %80 : vector<32x1xf32> to vector<32x8xf32>
    %82 = arith.divf %78, %81 : vector<32x8xf32>
    %cst_61 = arith.constant dense<0.000000e+00> : vector<32x4xf32>
    %83 = tpu.matmul %82, %61, %cst_61 {dimension_numbers = #tpu.dot_dimension_numbers<[1], [0], [0], [1], [0, 0, 1, 1], [], []>} : vector<32x8xf32>, vector<8x4xf32>, vector<32x4xf32> -> vector<32x4xf32>
    %84 = vector.extract_strided_slice %82 {offsets = [0, 0], sizes = [8, 8], strides = [1, 1]} : vector<32x8xf32> to vector<8x8xf32>
    %c0_62 = arith.constant 0 : index
    %c4_63 = arith.constant 4 : index
    %c0_64 = arith.constant 0 : index
    %c0_65 = arith.constant 0 : index
    %85 = vector.load %arg6[%c0_62, %c4_63, %c0_64, %c0_65] : memref<1x8x8x8xf32, #tpu.memory_space<vmem>>, vector<1x1x8x8xf32>
    %86 = vector.shape_cast %85 : vector<1x1x8x8xf32> to vector<8x8xf32>
    %87 = vector.shape_cast %84 : vector<8x8xf32> to vector<1x1x8x8xf32>
    tpu.vector_store %arg6[%c0_62, %c4_63, %c0_64, %c0_65], %87 {strides = array<i32>} : memref<1x8x8x8xf32, #tpu.memory_space<vmem>>, vector<1x1x8x8xf32>,
    %88 = vector.extract_strided_slice %83 {offsets = [0, 0], sizes = [8, 4], strides = [1, 1]} : vector<32x4xf32> to vector<8x4xf32>
    %c0_66 = arith.constant 0 : index
    %c0_67 = arith.constant 0 : index
    %c16_68 = arith.constant 16 : index
    %89 = vector.load %arg5[%c0_66, %c0_67, %c16_68] : memref<1x8x32xf32, #tpu.memory_space<vmem>>, vector<1x8x4xf32>
    %90 = vector.shape_cast %89 : vector<1x8x4xf32> to vector<8x4xf32>
    %91 = vector.shape_cast %88 : vector<8x4xf32> to vector<1x8x4xf32>
    tpu.vector_store %arg5[%c0_66, %c0_67, %c16_68], %91 {strides = array<i32>} : memref<1x8x32xf32, #tpu.memory_space<vmem>>, vector<1x8x4xf32>,
    %92 = vector.extract_strided_slice %82 {offsets = [8, 0], sizes = [8, 8], strides = [1, 1]} : vector<32x8xf32> to vector<8x8xf32>
    %c0_69 = arith.constant 0 : index
    %c5 = arith.constant 5 : index
    %c0_70 = arith.constant 0 : index
    %c0_71 = arith.constant 0 : index
    %93 = vector.load %arg6[%c0_69, %c5, %c0_70, %c0_71] : memref<1x8x8x8xf32, #tpu.memory_space<vmem>>, vector<1x1x8x8xf32>
    %94 = vector.shape_cast %93 : vector<1x1x8x8xf32> to vector<8x8xf32>
    %95 = vector.shape_cast %92 : vector<8x8xf32> to vector<1x1x8x8xf32>
    tpu.vector_store %arg6[%c0_69, %c5, %c0_70, %c0_71], %95 {strides = array<i32>} : memref<1x8x8x8xf32, #tpu.memory_space<vmem>>, vector<1x1x8x8xf32>,
    %96 = vector.extract_strided_slice %83 {offsets = [8, 0], sizes = [8, 4], strides = [1, 1]} : vector<32x4xf32> to vector<8x4xf32>
    %c0_72 = arith.constant 0 : index
    %c0_73 = arith.constant 0 : index
    %c20_74 = arith.constant 20 : index
    %97 = vector.load %arg5[%c0_72, %c0_73, %c20_74] : memref<1x8x32xf32, #tpu.memory_space<vmem>>, vector<1x8x4xf32>
    %98 = vector.shape_cast %97 : vector<1x8x4xf32> to vector<8x4xf32>
    %99 = vector.shape_cast %96 : vector<8x4xf32> to vector<1x8x4xf32>
    tpu.vector_store %arg5[%c0_72, %c0_73, %c20_74], %99 {strides = array<i32>} : memref<1x8x32xf32, #tpu.memory_space<vmem>>, vector<1x8x4xf32>,
    %100 = vector.extract_strided_slice %82 {offsets = [16, 0], sizes = [8, 8], strides = [1, 1]} : vector<32x8xf32> to vector<8x8xf32>
    %c0_75 = arith.constant 0 : index
    %c6 = arith.constant 6 : index
    %c0_76 = arith.constant 0 : index
    %c0_77 = arith.constant 0 : index
    %101 = vector.load %arg6[%c0_75, %c6, %c0_76, %c0_77] : memref<1x8x8x8xf32, #tpu.memory_space<vmem>>, vector<1x1x8x8xf32>
    %102 = vector.shape_cast %101 : vector<1x1x8x8xf32> to vector<8x8xf32>
    %103 = vector.shape_cast %100 : vector<8x8xf32> to vector<1x1x8x8xf32>
    tpu.vector_store %arg6[%c0_75, %c6, %c0_76, %c0_77], %103 {strides = array<i32>} : memref<1x8x8x8xf32, #tpu.memory_space<vmem>>, vector<1x1x8x8xf32>,
    %104 = vector.extract_strided_slice %83 {offsets = [16, 0], sizes = [8, 4], strides = [1, 1]} : vector<32x4xf32> to vector<8x4xf32>
    %c0_78 = arith.constant 0 : index
    %c0_79 = arith.constant 0 : index
    %c24_80 = arith.constant 24 : index
    %105 = vector.load %arg5[%c0_78, %c0_79, %c24_80] : memref<1x8x32xf32, #tpu.memory_space<vmem>>, vector<1x8x4xf32>
    %106 = vector.shape_cast %105 : vector<1x8x4xf32> to vector<8x4xf32>
    %107 = vector.shape_cast %104 : vector<8x4xf32> to vector<1x8x4xf32>
    tpu.vector_store %arg5[%c0_78, %c0_79, %c24_80], %107 {strides = array<i32>} : memref<1x8x32xf32, #tpu.memory_space<vmem>>, vector<1x8x4xf32>,
    %108 = vector.extract_strided_slice %82 {offsets = [24, 0], sizes = [8, 8], strides = [1, 1]} : vector<32x8xf32> to vector<8x8xf32>
    %c0_81 = arith.constant 0 : index
    %c7 = arith.constant 7 : index
    %c0_82 = arith.constant 0 : index
    %c0_83 = arith.constant 0 : index
    %109 = vector.load %arg6[%c0_81, %c7, %c0_82, %c0_83] : memref<1x8x8x8xf32, #tpu.memory_space<vmem>>, vector<1x1x8x8xf32>
    %110 = vector.shape_cast %109 : vector<1x1x8x8xf32> to vector<8x8xf32>
    %111 = vector.shape_cast %108 : vector<8x8xf32> to vector<1x1x8x8xf32>
    tpu.vector_store %arg6[%c0_81, %c7, %c0_82, %c0_83], %111 {strides = array<i32>} : memref<1x8x8x8xf32, #tpu.memory_space<vmem>>, vector<1x1x8x8xf32>,
    %112 = vector.extract_strided_slice %83 {offsets = [24, 0], sizes = [8, 4], strides = [1, 1]} : vector<32x4xf32> to vector<8x4xf32>
    %c0_84 = arith.constant 0 : index
    %c0_85 = arith.constant 0 : index
    %c28_86 = arith.constant 28 : index
    %113 = vector.load %arg5[%c0_84, %c0_85, %c28_86] : memref<1x8x32xf32, #tpu.memory_space<vmem>>, vector<1x8x4xf32>
    %114 = vector.shape_cast %113 : vector<1x8x4xf32> to vector<8x4xf32>
    %115 = vector.shape_cast %112 : vector<8x4xf32> to vector<1x8x4xf32>
    tpu.vector_store %arg5[%c0_84, %c0_85, %c28_86], %115 {strides = array<i32>} : memref<1x8x32xf32, #tpu.memory_space<vmem>>, vector<1x8x4xf32>,
    return
  }
  func.func @transform_0(%arg0: i32, %arg1: i32) -> (i32, i32, i32) {
    %c0_i32 = arith.constant 0 : i32
    %c0_i32_0 = arith.constant 0 : i32
    return %arg0, %arg1, %c0_i32 : i32, i32, i32
  }
  func.func @transform_1(%arg0: i32, %arg1: i32) -> (i32, i32, i32) {
    %c0_i32 = arith.constant 0 : i32
    %c0_i32_0 = arith.constant 0 : i32
    %c0_i32_1 = arith.constant 0 : i32
    return %arg0, %c0_i32, %c0_i32_0 : i32, i32, i32
  }
  func.func @transform_2(%arg0: i32, %arg1: i32) -> (i32, i32, i32) {
    %c0_i32 = arith.constant 0 : i32
    %c0_i32_0 = arith.constant 0 : i32
    %c0_i32_1 = arith.constant 0 : i32
    return %arg0, %c0_i32, %c0_i32_0 : i32, i32, i32
  }
  func.func @transform_3(%arg0: i32, %arg1: i32) -> (i32, i32, i32) {
    %c0_i32 = arith.constant 0 : i32
    %c0_i32_0 = arith.constant 0 : i32
    return %arg0, %arg1, %c0_i32 : i32, i32, i32
  }
  func.func @transform_4(%arg0: i32, %arg1: i32) -> (i32, i32, i32, i32) {
    %c0_i32 = arith.constant 0 : i32
    %c0_i32_0 = arith.constant 0 : i32
    %c0_i32_1 = arith.constant 0 : i32
    return %arg0, %c0_i32, %arg1, %c0_i32_0 : i32, i32, i32, i32
  }
}

module attributes {stable_mosaic.version = 11 : i64} {
  func.func @_qkv_linear_kernel(%arg0: i32, %arg1: i32, %arg2: memref<16x32xf32, #tpu.memory_space<vmem>>, %arg3: memref<32x48xf32, #tpu.memory_space<vmem>>, %arg4: memref<1x48xf32, #tpu.memory_space<vmem>>, %arg5: memref<16x32xf32, #tpu.memory_space<vmem>>, %arg6: memref<16x8xf32, #tpu.memory_space<vmem>>, %arg7: memref<16x8xf32, #tpu.memory_space<vmem>>, %arg8: memref<16x48xf32, #tpu.memory_space<vmem>>) attributes {dimension_semantics = [#tpu.dimension_semantics<parallel>, #tpu.dimension_semantics<arbitrary>], iteration_bounds = array<i64: 1, 1>, scalar_prefetch = 0 : i64, scratch_operands = 1 : i64, tpu.core_type = #tpu.core_type<tc>, window_params = [{transform_indices = @transform_0, window_bounds = array<i64: 16, 32>}, {transform_indices = @transform_1, window_bounds = array<i64: 32, 48>}, {pipeline_mode = #tpu.pipeline_mode<synchronous>, transform_indices = @transform_2, window_bounds = array<i64: 1, 48>}, {transform_indices = @transform_3, window_bounds = array<i64: 16, 32>}, {transform_indices = @transform_4, window_bounds = array<i64: 16, 8>}, {transform_indices = @transform_5, window_bounds = array<i64: 16, 8>}]} {
    %c0_i32 = arith.constant 0 : i32
    %0 = arith.cmpi eq, %arg1, %c0_i32 : i32
    %1 = arith.extui %0 : i1 to i32
    %c0_i32_0 = arith.constant 0 : i32
    %2 = arith.cmpi ne, %1, %c0_i32_0 : i32
    scf.if %2 {
      %cst_10 = arith.constant 0.000000e+00 : f32
      %12 = vector.broadcast %cst_10 : f32 to vector<16x48xf32>
      %c0_11 = arith.constant 0 : index
      %c0_12 = arith.constant 0 : index
      %13 = vector.load %arg8[%c0_11, %c0_12] : memref<16x48xf32, #tpu.memory_space<vmem>>, vector<16x48xf32>
      tpu.vector_store %arg8[%c0_11, %c0_12], %12 {strides = array<i32>} : memref<16x48xf32, #tpu.memory_space<vmem>>, vector<16x48xf32>,
    } else {
    }
    %c0 = arith.constant 0 : index
    %c0_1 = arith.constant 0 : index
    %3 = vector.load %arg8[%c0, %c0_1] : memref<16x48xf32, #tpu.memory_space<vmem>>, vector<16x48xf32>
    %c0_2 = arith.constant 0 : index
    %c0_3 = arith.constant 0 : index
    %4 = vector.load %arg2[%c0_2, %c0_3] : memref<16x32xf32, #tpu.memory_space<vmem>>, vector<16x32xf32>
    %c0_4 = arith.constant 0 : index
    %c0_5 = arith.constant 0 : index
    %5 = vector.load %arg3[%c0_4, %c0_5] : memref<32x48xf32, #tpu.memory_space<vmem>>, vector<32x48xf32>
    %cst = arith.constant dense<0.000000e+00> : vector<16x48xf32>
    %6 = tpu.matmul %4, %5, %cst {dimension_numbers = #tpu.dot_dimension_numbers<[1], [0], [0], [1], [0, 0, 1, 1], [], []>} : vector<16x32xf32>, vector<32x48xf32>, vector<16x48xf32> -> vector<16x48xf32>
    %7 = arith.addf %3, %6 : vector<16x48xf32>
    %c0_6 = arith.constant 0 : index
    %c0_7 = arith.constant 0 : index
    %8 = vector.load %arg8[%c0_6, %c0_7] : memref<16x48xf32, #tpu.memory_space<vmem>>, vector<16x48xf32>
    tpu.vector_store %arg8[%c0_6, %c0_7], %7 {strides = array<i32>} : memref<16x48xf32, #tpu.memory_space<vmem>>, vector<16x48xf32>,
    %c0_i32_8 = arith.constant 0 : i32
    %9 = arith.cmpi eq, %arg1, %c0_i32_8 : i32
    %10 = arith.extui %9 : i1 to i32
    %c0_i32_9 = arith.constant 0 : i32
    %11 = arith.cmpi ne, %10, %c0_i32_9 : i32
    scf.if %11 {
      %c0_10 = arith.constant 0 : index
      %c0_11 = arith.constant 0 : index
      %12 = vector.load %arg8[%c0_10, %c0_11] : memref<16x48xf32, #tpu.memory_space<vmem>>, vector<16x48xf32>
      %c0_12 = arith.constant 0 : index
      %c0_13 = arith.constant 0 : index
      %13 = vector.load %arg4[%c0_12, %c0_13] : memref<1x48xf32, #tpu.memory_space<vmem>>, vector<1x48xf32>
      %14 = vector.broadcast %13 : vector<1x48xf32> to vector<16x48xf32>
      %15 = arith.addf %12, %14 : vector<16x48xf32>
      %16 = vector.extract_strided_slice %15 {offsets = [0, 0], sizes = [16, 32], strides = [1, 1]} : vector<16x48xf32> to vector<16x32xf32>
      %c0_14 = arith.constant 0 : index
      %c0_15 = arith.constant 0 : index
      %17 = vector.load %arg5[%c0_14, %c0_15] : memref<16x32xf32, #tpu.memory_space<vmem>>, vector<16x32xf32>
      tpu.vector_store %arg5[%c0_14, %c0_15], %16 {strides = array<i32>} : memref<16x32xf32, #tpu.memory_space<vmem>>, vector<16x32xf32>,
      %18 = vector.extract_strided_slice %15 {offsets = [0, 32], sizes = [16, 8], strides = [1, 1]} : vector<16x48xf32> to vector<16x8xf32>
      %c0_16 = arith.constant 0 : index
      %c0_17 = arith.constant 0 : index
      %19 = vector.load %arg6[%c0_16, %c0_17] : memref<16x8xf32, #tpu.memory_space<vmem>>, vector<16x8xf32>
      tpu.vector_store %arg6[%c0_16, %c0_17], %18 {strides = array<i32>} : memref<16x8xf32, #tpu.memory_space<vmem>>, vector<16x8xf32>,
      %20 = vector.extract_strided_slice %15 {offsets = [0, 40], sizes = [16, 8], strides = [1, 1]} : vector<16x48xf32> to vector<16x8xf32>
      %c0_18 = arith.constant 0 : index
      %c0_19 = arith.constant 0 : index
      %21 = vector.load %arg7[%c0_18, %c0_19] : memref<16x8xf32, #tpu.memory_space<vmem>>, vector<16x8xf32>
      tpu.vector_store %arg7[%c0_18, %c0_19], %20 {strides = array<i32>} : memref<16x8xf32, #tpu.memory_space<vmem>>, vector<16x8xf32>,
    } else {
    }
    return
  }
  func.func @transform_0(%arg0: i32, %arg1: i32) -> (i32, i32) {
    %c0_i32 = arith.constant 0 : i32
    return %arg0, %arg1 : i32, i32
  }
  func.func @transform_1(%arg0: i32, %arg1: i32) -> (i32, i32) {
    %c0_i32 = arith.constant 0 : i32
    %c0_i32_0 = arith.constant 0 : i32
    return %arg1, %c0_i32 : i32, i32
  }
  func.func @transform_2(%arg0: i32, %arg1: i32) -> (i32, i32) {
    %c0_i32 = arith.constant 0 : i32
    %c0_i32_0 = arith.constant 0 : i32
    %c0_i32_1 = arith.constant 0 : i32
    return %c0_i32, %c0_i32_0 : i32, i32
  }
  func.func @transform_3(%arg0: i32, %arg1: i32) -> (i32, i32) {
    %c0_i32 = arith.constant 0 : i32
    %c0_i32_0 = arith.constant 0 : i32
    return %arg0, %c0_i32 : i32, i32
  }
  func.func @transform_4(%arg0: i32, %arg1: i32) -> (i32, i32) {
    %c0_i32 = arith.constant 0 : i32
    %c0_i32_0 = arith.constant 0 : i32
    return %arg0, %c0_i32 : i32, i32
  }
  func.func @transform_5(%arg0: i32, %arg1: i32) -> (i32, i32) {
    %c0_i32 = arith.constant 0 : i32
    %c0_i32_0 = arith.constant 0 : i32
    return %arg0, %c0_i32 : i32, i32
  }
}

</mosaic_0001>

<llo_original>
// kernel: gqa_forward.5
$region0: #{gqa_forward.5}
  #allocation0 [shape = 'u32[]', space=smem, size = 0x4, offset = 0x4, fixed_abs, tag = 'smem constant byte address 0x4 - core index']
  #allocation1 [shape = 'u32[144,128]{1,0:T(1,128)}', space=vmem, size = 0x12000, scoped, tag = 'internal scratch']
  #allocation2 [shape = 'f32[16,32]{1,0:T(8,128)}', space=vmem, size = 0x2000, scoped, tag = 'scratch operand']
  %s0 = inlined_call_operand.vmem [shape: f32[16,32], index: 0, kind: input, shape index: {}]
  %s1 = inlined_call_operand.vmem [shape: f32[32,32], index: 1, kind: input, shape index: {}]
  %s2 = inlined_call_operand.vmem [shape: f32[1,32], index: 2, kind: input, shape index: {}]
  %s3 = inlined_call_operand.hbm [shape: f32[16,32], index: 3, kind: output, shape index: {}]
  %s4 = sld [smem:[#allocation0]]
  $region30: #{gqa_forward.5} parent=0
    _
  %s6 = ssub.s32 1, %s4
  %s7 = scalar_select 0, %s6, %s4
  $region1: #{gqa_forward.5} parent=0
    #allocation3 [shape = 'u8[8192]{0}', space=vmem, size = 0x2000, scoped, tag = 'output window, operand 0, single buffered']
    #allocation4 [shape = 's32[1]{0}', space=sflag, size = 0x4, scoped, tag = 'scoped memory for gqa_forward.5']
    %8 = vsyncpa [#allocation4], 0
    // Predicated region
    $region2: #{gqa_forward.5} parent=1 // pred_check
      _
    $region3: #{gqa_forward.5} parent=1 // pred_check_branch
      %10 = sbr.rel (0) target = $region5
    $region4: #{gqa_forward.5} parent=1 // pred_region
      _
    $region5: #{gqa_forward.5} parent=1 // pred_fallthru
      _
    // Predicated region
    $region6: #{gqa_forward.5} parent=1 // pred_check
      _
    $region7: #{gqa_forward.5} parent=1 // pred_check_branch
      %12 = sbr.rel (0) target = $region9
    $region8: #{gqa_forward.5} parent=1 // pred_region
      _
    $region9: #{gqa_forward.5} parent=1 // pred_fallthru
      _
    // Predicated region
    $region10: #{gqa_forward.5} parent=1 // pred_check
      _
    $region11: #{gqa_forward.5} parent=1 // pred_check_branch
      %14 = sbr.rel (0) target = $region13
    $region12: #{gqa_forward.5} parent=1 // pred_region
      _
    $region13: #{gqa_forward.5} parent=1 // pred_fallthru
      _
    %p15 = scmp.eq.s32.totalorder 0, 0
    // Predicated region
    $region14: #{gqa_forward.5} parent=1 // pred_check
      %p16 = pneg %p15
    $region15: #{gqa_forward.5} parent=1 // pred_check_branch
      %18 = sbr.rel (%p16) target = $region17
    $region16: #{gqa_forward.5} parent=1 // pred_region
      %vm19 = vcmask 261120
      %20 = vst.msk [vmem:[#allocation2] sm:$0xff] %vm19, 0.0
      %21 = vst.msk [vmem:[#allocation2 + $0x8] sm:$0xff] %vm19, 0.0
    $region17: #{gqa_forward.5} parent=1 // pred_fallthru
      _
    %v22 = vld [vmem:[#allocation2] sm:$0xff]
    %v23 = vld [vmem:[#allocation2 + $0x8] sm:$0xff]
    %v24 = vld [vmem:[%s0] sm:$0xff]
    %v25 = vld [vmem:[%s0 + $0x8] sm:$0xff]
    %v26 = vld [vmem:[%s1] sm:$0xff]
    %v27 = vld [vmem:[%s1 + $0x8] sm:$0xff]
    %v28 = vld [vmem:[%s1 + $0x10] sm:$0xff]
    %v29 = vld [vmem:[%s1 + $0x18] sm:$0xff]
    %vm30 = vcmask 261120
    %v32 = vsel %vm30, %v24, 0
    %v35 = vsel %vm30, %v25, 0
    %37 = vmatprep.subr.mxu0 0.0
    %38 = vmatpush1.msra.mxu0 %v26
    %39 = vmatprep.subr.mxu0 0.0
    %40 = vmatpush1.msra.mxu0 %v27
    %41 = vmatprep.subr.mxu0 0.0
    %42 = vmatpush1.msra.mxu0 %v28
    %43 = vmatprep.subr.mxu0 0.0
    %44 = vmatpush1.msra.mxu0 %v29
    %45 = vmatprep.subr.mxu0 0.0
    %46 = vmatpush1.msra.mxu0 0.0
    %47 = vmatprep.subr.mxu0 0.0
    %48 = vmatpush1.msra.mxu0 0.0
    %49 = vmatprep.subr.mxu0 0.0
    %50 = vmatpush1.msra.mxu0 0.0
    %51 = vmatprep.subr.mxu0 0.0
    %52 = vmatpush1.msra.mxu0 0.0
    %53 = vmatprep.subr.mxu0 0.0
    %54 = vmatpush1.msra.mxu0 0.0
    %55 = vmatprep.subr.mxu0 0.0
    %56 = vmatpush1.msra.mxu0 0.0
    %57 = vmatprep.subr.mxu0 0.0
    %58 = vmatpush1.msra.mxu0 0.0
    %59 = vmatprep.subr.mxu0 0.0
    %60 = vmatpush1.msra.mxu0 0.0
    %61 = vmatprep.subr.mxu0 0.0
    %62 = vmatpush1.msra.mxu0 0.0
    %63 = vmatprep.subr.mxu0 0.0
    %64 = vmatpush1.msra.mxu0 0.0
    %65 = vmatprep.subr.mxu0 0.0
    %66 = vmatpush1.msra.mxu0 0.0
    %67 = vmatprep.subr.mxu0 0.0
    %68 = vmatpush1.msra.mxu0 0.0
    %69 = vmatprep.subr.mxu0 0.0
    %70 = vmatpush1.msra.mxu0 0.0
    %71 = vmatprep.subr.mxu0 0.0
    %72 = vmatpush1.msra.mxu0 0.0
    %73 = vmatprep.subr.mxu0 0.0
    %74 = vmatpush1.msra.mxu0 0.0
    %75 = vmatprep.subr.mxu0 0.0
    %76 = vmatpush1.msra.mxu0 0.0
    %77 = vmatprep.subr.mxu0 0.0
    %78 = vmatpush1.msra.mxu0 0.0
    %79 = vmatprep.subr.mxu0 0.0
    %80 = vmatpush1.msra.mxu0 0.0
    %81 = vmatprep.subr.mxu0 0.0
    %82 = vmatpush1.msra.mxu0 0.0
    %83 = vmatprep.subr.mxu0 0.0
    %84 = vmatpush1.msra.mxu0 0.0
    %85 = vmatprep.subr.mxu0 0.0
    %86 = vmatpush1.msra.mxu0 0.0
    %87 = vmatprep.subr.mxu0 0.0
    %88 = vmatpush1.msra.mxu0 0.0
    %89 = vmatprep.subr.mxu0 0.0
    %90 = vmatpush1.msra.mxu0 0.0
    %91 = vmatprep.subr.mxu0 0.0
    %92 = vmatpush1.msra.mxu0 0.0
    %93 = vmatprep.subr.mxu0 0.0
    %94 = vmatpush1.msra.mxu0 0.0
    %95 = vmatprep.subr.mxu0 0.0
    %96 = vmatpush1.msra.mxu0 0.0
    %97 = vmatprep.subr.mxu0 0.0
    %98 = vmatpush1.msra.mxu0 0.0
    %99 = vmatprep.subr.mxu0 0.0
    %100 = vmatpush1.msra.mxu0 0.0
    %101 = vmatprep.mubr.f32.mxu0 0.0
    %102 = vmatmul.mubr.f32.gmra.mrb[0].mxu0 %v32
    %v103 = vpop.f32.mrb[0].mxu0
    %v104 = vadd.f32 0.0, %v103
    %v105 = vpop.f32.mrb[0].mxu0
    %106 = vmatprep.mubr.f32.mxu0 0.0
    %107 = vmatmul.mubr.f32.gmra.mrb[0].mxu0 %v35
    %v108 = vpop.f32.mrb[0].mxu0
    %v109 = vadd.f32 0.0, %v108
    %v110 = vpop.f32.mrb[0].mxu0
    %111 = vdwg.mxu0
    %v112 = vadd.f32 %v22, %v104
    %v113 = vadd.f32 %v23, %v109
    %114 = vst.msk [vmem:[#allocation2] sm:$0xff] %vm30, %v112
    %115 = vst.msk [vmem:[#allocation2 + $0x8] sm:$0xff] %vm30, %v113
    // Predicated region
    $region18: #{gqa_forward.5} parent=1 // pred_check
      %p116 = pneg %p15
    $region19: #{gqa_forward.5} parent=1 // pred_check_branch
      %118 = sbr.rel (%p116) target = $region21
    $region20: #{gqa_forward.5} parent=1 // pred_region
      %v119 = vld [vmem:[#allocation2] sm:$0xff]
      %v120 = vld [vmem:[#allocation2 + $0x8] sm:$0xff]
      %v121 = vld [vmem:[%s2] sm:$0x1]
      %v123 = vlaneseq
      %v124 = vshrl.u32 %v123, 7
      %v125 = vsub.s32 0, %v124
      %v126 = vrot.slane %v121, %v125
      %v128 = vadd.f32 %v119, %v126
      %v129 = vadd.f32 %v120, %v126
      %130 = vst.msk [vmem:[#allocation3] sm:$0xff] %vm30, %v128
      %131 = vst.msk [vmem:[#allocation3 + $0x8] sm:$0xff] %vm30, %v129
    $region21: #{gqa_forward.5} parent=1 // pred_fallthru
      _
    // Predicated region
    $region22: #{gqa_forward.5} parent=1 // pred_check
      _
    $region23: #{gqa_forward.5} parent=1 // pred_check_branch
      %133 = sbr.rel (0) target = $region25
    $region24: #{gqa_forward.5} parent=1 // pred_region
      %s135 = ssub.s32 256, 256
      %136 = vsyncadd [#allocation4], %s135
      %s137 = sshll.u32 [#allocation3], 4
      %s138 = int_to_ptr.vmem [resolvable:$true] %s137
      %143 = dma.vmem_to_hbm [thread:$0]  %s138, 256, %s3, [#allocation4], 128, 128, 8
    $region25: #{gqa_forward.5} parent=1 // pred_fallthru
      _
    // Predicated region
    $region26: #{gqa_forward.5} parent=1 // pred_check
      _
    $region27: #{gqa_forward.5} parent=1 // pred_check_branch
      %145 = sbr.rel (0) target = $region29
    $region28: #{gqa_forward.5} parent=1 // pred_region
      %146 = dma.done [#allocation4], 256
    $region29: #{gqa_forward.5} parent=1 // pred_fallthru
      _
    %147 = vsyncpa [#allocation4], 1

// kernel: gqa_forward.3
$region0: #{gqa_forward.3}
  #allocation0 [shape = 'u32[]', space=smem, size = 0x4, offset = 0x4, fixed_abs, tag = 'smem constant byte address 0x4 - core index']
  #allocation1 [shape = 'u32[144,128]{1,0:T(1,128)}', space=vmem, size = 0x12000, scoped, tag = 'internal scratch']
  #allocation2 [shape = 'f32[16,48]{1,0:T(8,128)}', space=vmem, size = 0x2000, scoped, tag = 'scratch operand']
  %s0 = inlined_call_operand.vmem [shape: f32[16,32], index: 0, kind: input, shape index: {}]
  %s1 = inlined_call_operand.hbm [shape: f32[32,48], index: 1, kind: input, shape index: {}]
  %s2 = inlined_call_operand.vmem [shape: f32[1,48], index: 2, kind: input, shape index: {}]
  %s3 = inlined_call_operand.vmem [shape: f32[16,32], index: 3, kind: output, shape index: {0}]
  %s4 = inlined_call_operand.vmem [shape: f32[16,8], index: 4, kind: output, shape index: {1}]
  %s5 = inlined_call_operand.vmem [shape: f32[16,8], index: 5, kind: output, shape index: {2}]
  %6 = xla_tuple %s3, %s4, %s5
  %s7 = sld [smem:[#allocation0]]
  $region50: #{gqa_forward.3} parent=0
    _
  %s9 = ssub.s32 1, %s7
  %s10 = scalar_select 0, %s9, %s7
  $region1: #{gqa_forward.3} parent=0
    #allocation3 [shape = 'u8[16384]{0}', space=vmem, size = 0x4000, scoped, tag = 'input window, operand 1, single buffered']
    #allocation4 [shape = 's32[1]{0}', space=sflag, size = 0x4, scoped, tag = 'scoped memory for gqa_forward.3']
    %11 = vsyncpa [#allocation4], 0
    // Predicated region
    $region2: #{gqa_forward.3} parent=1 // pred_check
      _
    $region3: #{gqa_forward.3} parent=1 // pred_check_branch
      %13 = sbr.rel (0) target = $region5
    $region4: #{gqa_forward.3} parent=1 // pred_region
      _
    $region5: #{gqa_forward.3} parent=1 // pred_fallthru
      _
    // Predicated region
    $region6: #{gqa_forward.3} parent=1 // pred_check
      _
    $region7: #{gqa_forward.3} parent=1 // pred_check_branch
      %15 = sbr.rel (0) target = $region9
    $region8: #{gqa_forward.3} parent=1 // pred_region
      %s17 = ssub.s32 512, 512
      %18 = vsyncadd [#allocation4], %s17
      %s19 = sshll.u32 [#allocation3], 4
      %s20 = int_to_ptr.vmem [resolvable:$true] %s19
      %25 = dma.hbm_to_vmem [thread:$0]  %s1, 512, %s20, [#allocation4], 128, 128, 8
    $region9: #{gqa_forward.3} parent=1 // pred_fallthru
      _
    // Predicated region
    $region10: #{gqa_forward.3} parent=1 // pred_check
      _
    $region11: #{gqa_forward.3} parent=1 // pred_check_branch
      %27 = sbr.rel (0) target = $region13
    $region12: #{gqa_forward.3} parent=1 // pred_region
      _
    $region13: #{gqa_forward.3} parent=1 // pred_fallthru
      _
    // Predicated region
    $region14: #{gqa_forward.3} parent=1 // pred_check
      _
    $region15: #{gqa_forward.3} parent=1 // pred_check_branch
      %29 = sbr.rel (0) target = $region17
    $region16: #{gqa_forward.3} parent=1 // pred_region
      %30 = dma.done [#allocation4], 512
    $region17: #{gqa_forward.3} parent=1 // pred_fallthru
      _
    %p31 = scmp.eq.s32.totalorder 0, 0
    // Predicated region
    $region18: #{gqa_forward.3} parent=1 // pred_check
      %p32 = pneg %p31
    $region19: #{gqa_forward.3} parent=1 // pred_check_branch
      %34 = sbr.rel (%p32) target = $region21
    $region20: #{gqa_forward.3} parent=1 // pred_region
      %vm35 = vcmask 392192
      %36 = vst.msk [vmem:[#allocation2] sm:$0xff] %vm35, 0.0
      %37 = vst.msk [vmem:[#allocation2 + $0x8] sm:$0xff] %vm35, 0.0
    $region21: #{gqa_forward.3} parent=1 // pred_fallthru
      _
    %v38 = vld [vmem:[#allocation2] sm:$0xff]
    %v39 = vld [vmem:[#allocation2 + $0x8] sm:$0xff]
    %v40 = vld [vmem:[%s0] sm:$0xff]
    %v41 = vld [vmem:[%s0 + $0x8] sm:$0xff]
    %v42 = vld [vmem:[#allocation3] sm:$0xff]
    %v43 = vld [vmem:[#allocation3 + $0x8] sm:$0xff]
    %v44 = vld [vmem:[#allocation3 + $0x10] sm:$0xff]
    %v45 = vld [vmem:[#allocation3 + $0x18] sm:$0xff]
    %vm46 = vcmask 261120
    %v48 = vsel %vm46, %v40, 0
    %v51 = vsel %vm46, %v41, 0
    %53 = vmatprep.subr.mxu0 0.0
    %54 = vmatpush1.msra.mxu0 %v42
    %55 = vmatprep.subr.mxu0 0.0
    %56 = vmatpush1.msra.mxu0 %v43
    %57 = vmatprep.subr.mxu0 0.0
    %58 = vmatpush1.msra.mxu0 %v44
    %59 = vmatprep.subr.mxu0 0.0
    %60 = vmatpush1.msra.mxu0 %v45
    %61 = vmatprep.subr.mxu0 0.0
    %62 = vmatpush1.msra.mxu0 0.0
    %63 = vmatprep.subr.mxu0 0.0
    %64 = vmatpush1.msra.mxu0 0.0
    %65 = vmatprep.subr.mxu0 0.0
    %66 = vmatpush1.msra.mxu0 0.0
    %67 = vmatprep.subr.mxu0 0.0
    %68 = vmatpush1.msra.mxu0 0.0
    %69 = vmatprep.subr.mxu0 0.0
    %70 = vmatpush1.msra.mxu0 0.0
    %71 = vmatprep.subr.mxu0 0.0
    %72 = vmatpush1.msra.mxu0 0.0
    %73 = vmatprep.subr.mxu0 0.0
    %74 = vmatpush1.msra.mxu0 0.0
    %75 = vmatprep.subr.mxu0 0.0
    %76 = vmatpush1.msra.mxu0 0.0
    %77 = vmatprep.subr.mxu0 0.0
    %78 = vmatpush1.msra.mxu0 0.0
    %79 = vmatprep.subr.mxu0 0.0
    %80 = vmatpush1.msra.mxu0 0.0
    %81 = vmatprep.subr.mxu0 0.0
    %82 = vmatpush1.msra.mxu0 0.0
    %83 = vmatprep.subr.mxu0 0.0
    %84 = vmatpush1.msra.mxu0 0.0
    %85 = vmatprep.subr.mxu0 0.0
    %86 = vmatpush1.msra.mxu0 0.0
    %87 = vmatprep.subr.mxu0 0.0
    %88 = vmatpush1.msra.mxu0 0.0
    %89 = vmatprep.subr.mxu0 0.0
    %90 = vmatpush1.msra.mxu0 0.0
    %91 = vmatprep.subr.mxu0 0.0
    %92 = vmatpush1.msra.mxu0 0.0
    %93 = vmatprep.subr.mxu0 0.0
    %94 = vmatpush1.msra.mxu0 0.0
    %95 = vmatprep.subr.mxu0 0.0
    %96 = vmatpush1.msra.mxu0 0.0
    %97 = vmatprep.subr.mxu0 0.0
    %98 = vmatpush1.msra.mxu0 0.0
    %99 = vmatprep.subr.mxu0 0.0
    %100 = vmatpush1.msra.mxu0 0.0
    %101 = vmatprep.subr.mxu0 0.0
    %102 = vmatpush1.msra.mxu0 0.0
    %103 = vmatprep.subr.mxu0 0.0
    %104 = vmatpush1.msra.mxu0 0.0
    %105 = vmatprep.subr.mxu0 0.0
    %106 = vmatpush1.msra.mxu0 0.0
    %107 = vmatprep.subr.mxu0 0.0
    %108 = vmatpush1.msra.mxu0 0.0
    %109 = vmatprep.subr.mxu0 0.0
    %110 = vmatpush1.msra.mxu0 0.0
    %111 = vmatprep.subr.mxu0 0.0
    %112 = vmatpush1.msra.mxu0 0.0
    %113 = vmatprep.subr.mxu0 0.0
    %114 = vmatpush1.msra.mxu0 0.0
    %115 = vmatprep.subr.mxu0 0.0
    %116 = vmatpush1.msra.mxu0 0.0
    %117 = vmatprep.mubr.f32.mxu0 0.0
    %118 = vmatmul.mubr.f32.gmra.mrb[0].mxu0 %v48
    %v119 = vpop.f32.mrb[0].mxu0
    %v120 = vadd.f32 0.0, %v119
    %v121 = vpop.f32.mrb[0].mxu0
    %122 = vmatprep.mubr.f32.mxu0 0.0
    %123 = vmatmul.mubr.f32.gmra.mrb[0].mxu0 %v51
    %v124 = vpop.f32.mrb[0].mxu0
    %v125 = vadd.f32 0.0, %v124
    %v126 = vpop.f32.mrb[0].mxu0
    %127 = vdwg.mxu0
    %v128 = vadd.f32 %v38, %v120
    %v129 = vadd.f32 %v39, %v125
    %vm130 = vcmask 392192
    %131 = vst.msk [vmem:[#allocation2] sm:$0xff] %vm130, %v128
    %132 = vst.msk [vmem:[#allocation2 + $0x8] sm:$0xff] %vm130, %v129
    // Predicated region
    $region22: #{gqa_forward.3} parent=1 // pred_check
      %p133 = pneg %p31
    $region23: #{gqa_forward.3} parent=1 // pred_check_branch
      %135 = sbr.rel (%p133) target = $region25
    $region24: #{gqa_forward.3} parent=1 // pred_region
      %v136 = vld [vmem:[#allocation2] sm:$0xff]
      %v137 = vld [vmem:[#allocation2 + $0x8] sm:$0xff]
      %v138 = vld [vmem:[%s2] sm:$0x1]
      %v140 = vlaneseq
      %v141 = vshrl.u32 %v140, 7
      %v142 = vsub.s32 0, %v141
      %v143 = vrot.slane %v138, %v142
      %v145 = vadd.f32 %v136, %v143
      %v146 = vadd.f32 %v137, %v143
      %147 = vst.msk [vmem:[%s3] sm:$0xff] %vm46, %v145
      %148 = vst.msk [vmem:[%s3 + $0x8] sm:$0xff] %vm46, %v146
      %151 = vrot.lane.b32.xlu0 %v145, 96
      %v152 = vpop.permute.xlu0 %151
      %153 = vrot.lane.b32.xlu0 %v146, 96
      %v154 = vpop.permute.xlu0 %153
      %vm157 = vcmask 64512
      %158 = vst.msk [vmem:[%s4] sm:$0xff] %vm157, %v152
      %159 = vst.msk [vmem:[%s4 + $0x8] sm:$0xff] %vm157, %v154
      %160 = vrot.lane.b32.xlu0 %v145, 88
      %v161 = vpop.permute.xlu0 %160
      %162 = vrot.lane.b32.xlu0 %v146, 88
      %v163 = vpop.permute.xlu0 %162
      %166 = vst.msk [vmem:[%s5] sm:$0xff] %vm157, %v161
      %167 = vst.msk [vmem:[%s5 + $0x8] sm:$0xff] %vm157, %v163
    $region25: #{gqa_forward.3} parent=1 // pred_fallthru
      _
    // Predicated region
    $region26: #{gqa_forward.3} parent=1 // pred_check
      _
    $region27: #{gqa_forward.3} parent=1 // pred_check_branch
      %169 = sbr.rel (0) target = $region29
    $region28: #{gqa_forward.3} parent=1 // pred_region
      _
    $region29: #{gqa_forward.3} parent=1 // pred_fallthru
      _
    // Predicated region
    $region30: #{gqa_forward.3} parent=1 // pred_check
      _
    $region31: #{gqa_forward.3} parent=1 // pred_check_branch
      %171 = sbr.rel (0) target = $region33
    $region32: #{gqa_forward.3} parent=1 // pred_region
      _
    $region33: #{gqa_forward.3} parent=1 // pred_fallthru
      _
    // Predicated region
    $region34: #{gqa_forward.3} parent=1 // pred_check
      _
    $region35: #{gqa_forward.3} parent=1 // pred_check_branch
      %173 = sbr.rel (0) target = $region37
    $region36: #{gqa_forward.3} parent=1 // pred_region
      _
    $region37: #{gqa_forward.3} parent=1 // pred_fallthru
      _
    // Predicated region
    $region38: #{gqa_forward.3} parent=1 // pred_check
      _
    $region39: #{gqa_forward.3} parent=1 // pred_check_branch
      %175 = sbr.rel (0) target = $region41
    $region40: #{gqa_forward.3} parent=1 // pred_region
      _
    $region41: #{gqa_forward.3} parent=1 // pred_fallthru
      _
    // Predicated region
    $region42: #{gqa_forward.3} parent=1 // pred_check
      _
    $region43: #{gqa_forward.3} parent=1 // pred_check_branch
      %177 = sbr.rel (0) target = $region45
    $region44: #{gqa_forward.3} parent=1 // pred_region
      _
    $region45: #{gqa_forward.3} parent=1 // pred_fallthru
      _
    // Predicated region
    $region46: #{gqa_forward.3} parent=1 // pred_check
      _
    $region47: #{gqa_forward.3} parent=1 // pred_check_branch
      %179 = sbr.rel (0) target = $region49
    $region48: #{gqa_forward.3} parent=1 // pred_region
      _
    $region49: #{gqa_forward.3} parent=1 // pred_fallthru
      _
    %180 = vsyncpa [#allocation4], 1

// kernel: gqa_forward.4
$region0: #{gqa_forward.4}
  #allocation0 [shape = 'u32[]', space=smem, size = 0x4, offset = 0x4, fixed_abs, tag = 'smem constant byte address 0x4 - core index']
  #allocation1 [shape = 'u32[144,128]{1,0:T(1,128)}', space=vmem, size = 0x12000, scoped, tag = 'internal scratch']
  %s0 = inlined_call_operand.vmem [shape: f32[2,8,32], index: 0, kind: input, shape index: {}]
  %s1 = inlined_call_operand.vmem [shape: f32[2,8,8], index: 1, kind: input, shape index: {}]
  %s2 = inlined_call_operand.vmem [shape: f32[2,8,8], index: 2, kind: input, shape index: {}]
  %s3 = inlined_call_operand.vmem [shape: f32[2,8,32], index: 3, kind: output, shape index: {0}]
  %s4 = inlined_call_operand.hbm [shape: f32[2,8,8,8], index: 4, kind: output, shape index: {1}]
  %5 = xla_tuple %s3, %s4
  %s6 = sld [smem:[#allocation0]]
  $region53: #{gqa_forward.4} parent=0
    _
  %s8 = ssub.s32 1, %s6
  %s9 = scalar_select 0, %s8, %s6
  $region1: #{gqa_forward.4} parent=0
    #allocation2 [shape = 'u8[65536]{0}', space=vmem, size = 0x10000, scoped, tag = 'output window, operand 1']
    #allocation3 [shape = 's32[2]{0}', space=sflag, size = 0x8, scoped, tag = 'scoped memory for gqa_forward.4']
    %10 = vsyncpa [#allocation3], 0
    %s11 = scalar_lea.sflag [#allocation3], 1
    %12 = vsyncpa %s11, 0
    loop: start=0, step=1, limit=4
    $region2: #{gqa_forward.4} parent=1 // loop_pre_header
      _
    $region3: #{gqa_forward.4} parent=1 // loop_header
      %s14 = sphi 0, %s18
      %p15 = scmp.ge.s32.totalorder %s14, 4
      %s21 = sphi 0, %s33
      %s22 = sphi 0, %s29
      %s23 = sphi 0, %s21
      %s24 = sphi 0, %s22
      %s25 = sphi 0, %s23
      %s26 = sphi 0, %s24
      %s38 = sphi 0, %s40
      %s41 = sphi 0, %s38
      %s42 = sphi 0, %s41
      %s58 = sphi 0, %s42
      %s64 = sphi 0, %s66
      %s67 = sphi 0, %s64
      %s68 = sphi 0, %s67
      %s84 = sphi 0, %s68
      %s90 = sphi 0, %s92
      %s93 = sphi 0, %s90
      %s94 = sphi 0, %s93
      %s110 = sphi 0, %s94
      %s118 = sphi 0, %s120
      %s121 = sphi 0, %s118
      %s122 = sphi 0, %s121
      %s138 = sphi 0, %s122
      %s146 = sphi 0, %s148
      %s149 = sphi 0, %s146
      %s150 = sphi 0, %s149
      %s166 = sphi 0, %s150
    $region4: #{gqa_forward.4} parent=1 // loop_header_branch
      %17 = sbr.rel (%p15) target = $region8
    $region5: #{gqa_forward.4} parent=1 // loop_body
      %s19 = ssub.s32 %s14, 1
      %s20 = ssub.s32 %s14, 2
      %s27 = sadd.s32 1, %s22
      %p28 = scmp.ge.s32.totalorder %s27, 1
      %s29 = scalar_select %p28, 0, %s27
      %s30 = sadd.s32 1, %s21
      %s31 = scalar_select %p28, %s30, %s21
      %p32 = scmp.ge.s32.totalorder %s31, 2
      %s33 = scalar_select %p32, 0, %s31
      %s34 = ssub.s32 %s21, %s33
      %s35 = ssub.s32 %s22, %s29
      %s36 = sor.u32 %s34, %s35
      %p37 = scmp.eq.s32.totalorder %s36, 0
      %s39 = sadd.s32 %s38, 1
      %s40 = scalar_select %p37, %s38, %s39
      %p43 = pneg %p37
      %p44 = scmp.eq.s32.totalorder %s14, 1
      %p45 = por %p43, %p44
      %p46 = scmp.ne.s32.totalorder %s38, %s41
      %p47 = scmp.eq.s32.totalorder %s14, 0
      %p48 = por %p46, %p47
      %p49 = scmp.ne.s32.totalorder %s38, %s41
      %p50 = scmp.eq.s32.totalorder %s19, 1
      %p51 = por %p49, %p50
      %p52 = scmp.ne.s32.totalorder %s41, %s42
      %p53 = scmp.eq.s32.totalorder %s19, 0
      %p54 = por %p52, %p53
      %p55 = scmp.ne.s32.totalorder %s41, %s42
      %p56 = scmp.eq.s32.totalorder %s20, 1
      %p57 = por %p55, %p56
      %p59 = scmp.ne.s32.totalorder %s42, %s58
      %p60 = scmp.eq.s32.totalorder %s20, 0
      %p61 = por %p59, %p60
      %s62 = ssub.s32 %s21, %s33
      %p63 = scmp.eq.s32.totalorder %s62, 0
      %s65 = sadd.s32 %s64, 1
      %s66 = scalar_select %p63, %s64, %s65
      %p69 = pneg %p63
      %p70 = scmp.eq.s32.totalorder %s14, 1
      %p71 = por %p69, %p70
      %p72 = scmp.ne.s32.totalorder %s64, %s67
      %p73 = scmp.eq.s32.totalorder %s14, 0
      %p74 = por %p72, %p73
      %p75 = scmp.ne.s32.totalorder %s64, %s67
      %p76 = scmp.eq.s32.totalorder %s19, 1
      %p77 = por %p75, %p76
      %p78 = scmp.ne.s32.totalorder %s67, %s68
      %p79 = scmp.eq.s32.totalorder %s19, 0
      %p80 = por %p78, %p79
      %p81 = scmp.ne.s32.totalorder %s67, %s68
      %p82 = scmp.eq.s32.totalorder %s20, 1
      %p83 = por %p81, %p82
      %p85 = scmp.ne.s32.totalorder %s68, %s84
      %p86 = scmp.eq.s32.totalorder %s20, 0
      %p87 = por %p85, %p86
      %s88 = ssub.s32 %s21, %s33
      %p89 = scmp.eq.s32.totalorder %s88, 0
      %s91 = sadd.s32 %s90, 1
      %s92 = scalar_select %p89, %s90, %s91
      %p95 = pneg %p89
      %p96 = scmp.eq.s32.totalorder %s14, 1
      %p97 = por %p95, %p96
      %p98 = scmp.ne.s32.totalorder %s90, %s93
      %p99 = scmp.eq.s32.totalorder %s14, 0
      %p100 = por %p98, %p99
      %p101 = scmp.ne.s32.totalorder %s90, %s93
      %p102 = scmp.eq.s32.totalorder %s19, 1
      %p103 = por %p101, %p102
      %p104 = scmp.ne.s32.totalorder %s93, %s94
      %p105 = scmp.eq.s32.totalorder %s19, 0
      %p106 = por %p104, %p105
      %p107 = scmp.ne.s32.totalorder %s93, %s94
      %p108 = scmp.eq.s32.totalorder %s20, 1
      %p109 = por %p107, %p108
      %p111 = scmp.ne.s32.totalorder %s94, %s110
      %p112 = scmp.eq.s32.totalorder %s20, 0
      %p113 = por %p111, %p112
      %s114 = ssub.s32 %s21, %s33
      %s115 = ssub.s32 %s22, %s29
      %s116 = sor.u32 %s114, %s115
      %p117 = scmp.eq.s32.totalorder %s116, 0
      %s119 = sadd.s32 %s118, 1
      %s120 = scalar_select %p117, %s118, %s119
      %p123 = pneg %p117
      %p124 = scmp.eq.s32.totalorder %s14, 1
      %p125 = por %p123, %p124
      %p126 = scmp.ne.s32.totalorder %s118, %s121
      %p127 = scmp.eq.s32.totalorder %s14, 0
      %p128 = por %p126, %p127
      %p129 = scmp.ne.s32.totalorder %s118, %s121
      %p130 = scmp.eq.s32.totalorder %s19, 1
      %p131 = por %p129, %p130
      %p132 = scmp.ne.s32.totalorder %s121, %s122
      %p133 = scmp.eq.s32.totalorder %s19, 0
      %p134 = por %p132, %p133
      %p135 = scmp.ne.s32.totalorder %s121, %s122
      %p136 = scmp.eq.s32.totalorder %s20, 1
      %p137 = por %p135, %p136
      %p139 = scmp.ne.s32.totalorder %s122, %s138
      %p140 = scmp.eq.s32.totalorder %s20, 0
      %p141 = por %p139, %p140
      %s142 = ssub.s32 %s21, %s33
      %s143 = ssub.s32 %s22, %s29
      %s144 = sor.u32 %s142, %s143
      %p145 = scmp.eq.s32.totalorder %s144, 0
      %s147 = sadd.s32 %s146, 1
      %s148 = scalar_select %p145, %s146, %s147
      %p151 = pneg %p145
      %p152 = scmp.eq.s32.totalorder %s14, 1
      %p153 = por %p151, %p152
      %p154 = scmp.ne.s32.totalorder %s146, %s149
      %p155 = scmp.eq.s32.totalorder %s14, 0
      %p156 = por %p154, %p155
      %p157 = scmp.ne.s32.totalorder %s146, %s149
      %p158 = scmp.eq.s32.totalorder %s19, 1
      %p159 = por %p157, %p158
      %p160 = scmp.ne.s32.totalorder %s149, %s150
      %p161 = scmp.eq.s32.totalorder %s19, 0
      %p162 = por %p160, %p161
      %p163 = scmp.ne.s32.totalorder %s149, %s150
      %p164 = scmp.eq.s32.totalorder %s20, 1
      %p165 = por %p163, %p164
      %p167 = scmp.ne.s32.totalorder %s150, %s166
      %p168 = scmp.eq.s32.totalorder %s20, 0
      %p169 = por %p167, %p168
      %p170 = scmp.le.s32.totalorder 1, %s14
      %p171 = scmp.lt.s32.totalorder %s14, 3
      %p172 = pnand %p170, %p171
      %p173 = pneg %p172
      // Predicated region
      $region9: #{gqa_forward.4} parent=5 // pred_check
        _
      $region10: #{gqa_forward.4} parent=5 // pred_check_branch
        %175 = sbr.rel (%p172) target = $region12
      $region11: #{gqa_forward.4} parent=5 // pred_region
        %s176 = ssub.s32 %s14, 1
        // Predicated region
        $region13: #{gqa_forward.4} parent=11 // pred_check
          %p177 = pneg %p80
        $region14: #{gqa_forward.4} parent=11 // pred_check_branch
          %179 = sbr.rel (%p177) target = $region16
        $region15: #{gqa_forward.4} parent=11 // pred_region
          %p180 = scmp.lt.s32.totalorder %s23, 1
          %s181 = scalar_select %p180, %s23, 1
          %s182 = smul.addr %s181, 8
          %s183 = scalar_lea.vmem %s1, %s182
        $region16: #{gqa_forward.4} parent=11 // pred_fallthru
          _
        // Predicated region
        $region17: #{gqa_forward.4} parent=11 // pred_check
          %p184 = pneg %p106
        $region18: #{gqa_forward.4} parent=11 // pred_check_branch
          %186 = sbr.rel (%p184) target = $region20
        $region19: #{gqa_forward.4} parent=11 // pred_region
          %p187 = scmp.lt.s32.totalorder %s23, 1
          %s188 = scalar_select %p187, %s23, 1
          %s189 = smul.addr %s188, 8
          %s190 = scalar_lea.vmem %s2, %s189
        $region20: #{gqa_forward.4} parent=11 // pred_fallthru
          _
      $region12: #{gqa_forward.4} parent=5 // pred_fallthru
        _
      %p191 = scmp.lt.s32.totalorder %s14, 2
      // Predicated region
      $region21: #{gqa_forward.4} parent=5 // pred_check
        %p192 = pneg %p191
      $region22: #{gqa_forward.4} parent=5 // pred_check_branch
        %194 = sbr.rel (%p192) target = $region24
      $region23: #{gqa_forward.4} parent=5 // pred_region
        // Predicated region
        $region25: #{gqa_forward.4} parent=23 // pred_check
          %p195 = pneg %p48
        $region26: #{gqa_forward.4} parent=23 // pred_check_branch
          %197 = sbr.rel (%p195) target = $region28
        $region27: #{gqa_forward.4} parent=23 // pred_region
          %p198 = scmp.lt.s32.totalorder %s21, 1
          %s199 = scalar_select %p198, %s21, 1
          %p200 = scmp.lt.s32.totalorder %s22, 0
          %s201 = scalar_select %p200, %s22, 0
          %s202 = sadd.s32 %s201, %s199
          %s203 = smul.addr %s202, 8
          %s204 = scalar_lea.vmem %s0, %s203
        $region28: #{gqa_forward.4} parent=23 // pred_fallthru
          _
      $region24: #{gqa_forward.4} parent=5 // pred_fallthru
        _
      %p205 = scmp.le.s32.totalorder 1, %s14
      %p206 = scmp.lt.s32.totalorder %s14, 3
      %p207 = pnand %p205, %p206
      %p208 = pneg %p207
      // Predicated region
      $region29: #{gqa_forward.4} parent=5 // pred_check
        _
      $region30: #{gqa_forward.4} parent=5 // pred_check_branch
        %210 = sbr.rel (%p207) target = $region32
      $region31: #{gqa_forward.4} parent=5 // pred_region
        %s211 = ssub.s32 %s14, 1
        %p212 = scmp.lt.s32.totalorder %s23, 1
        %s213 = scalar_select %p212, %s23, 1
        %p214 = scmp.lt.s32.totalorder %s24, 0
        %s215 = scalar_select %p214, %s24, 0
        %s216 = sadd.s32 %s215, %s213
        %s217 = smul.addr %s216, 8
        %s218 = scalar_lea.vmem %s0, %s217
        %p219 = pneg %p54
        %p220 = pneg %p51
        %p221 = scmp.lt.s32.totalorder %s23, 1
        %s222 = scalar_select %p221, %s23, 1
        %s223 = smul.addr %s222, 8
        %s224 = scalar_lea.vmem %s1, %s223
        %p225 = pneg %p80
        %p226 = pneg %p77
        %p227 = scmp.lt.s32.totalorder %s23, 1
        %s228 = scalar_select %p227, %s23, 1
        %s229 = smul.addr %s228, 8
        %s230 = scalar_lea.vmem %s2, %s229
        %p231 = pneg %p106
        %p232 = pneg %p103
        %p233 = pneg %p134
        %p234 = pneg %p131
        %p235 = scmp.lt.s32.totalorder %s23, 1
        %s236 = scalar_select %p235, %s23, 1
        %p237 = scmp.lt.s32.totalorder %s24, 0
        %s238 = scalar_select %p237, %s24, 0
        %s239 = sadd.s32 %s238, %s236
        %s240 = smul.addr %s239, 8
        %s241 = scalar_lea.vmem %s3, %s240
        %p242 = pneg %p162
        %p243 = pneg %p159
        %s244 = sand.u32 %s149, 1
        %s245 = scalar_lea.sflag [#allocation3], %s244
        %s246 = sand.u32 %s149, 1
        %s247 = smul.addr %s246, 64
        %s248 = scalar_lea.vmem [#allocation2], %s247
        %p249 = scmp.lt.s32.totalorder %s23, 1
        %s250 = scalar_select %p249, %s23, 1
        %p251 = scmp.lt.s32.totalorder %s24, 0
        %s252 = scalar_select %p251, %s24, 0
        %s253 = sadd.s32 %s252, %s250
        %s254 = smul.addr %s253, 8
        %s255 = scalar_lea.vmem %s0, %s254
        %p256 = scmp.lt.s32.totalorder %s23, 1
        %s257 = scalar_select %p256, %s23, 1
        %s258 = smul.addr %s257, 8
        %s259 = scalar_lea.vmem %s1, %s258
        %p260 = scmp.lt.s32.totalorder %s23, 1
        %s261 = scalar_select %p260, %s23, 1
        %s262 = smul.addr %s261, 8
        %s263 = scalar_lea.vmem %s2, %s262
        %p264 = scmp.lt.s32.totalorder %s23, 1
        %s265 = scalar_select %p264, %s23, 1
        %p266 = scmp.lt.s32.totalorder %s24, 0
        %s267 = scalar_select %p266, %s24, 0
        %s268 = sadd.s32 %s267, %s265
        %s269 = smul.addr %s268, 8
        %s270 = scalar_lea.vmem %s3, %s269
        %v271 = vld [vmem:[%s259] sm:$0xff]
        %v272 = vld [vmem:[%s263] sm:$0xff]
        %v273 = vld [vmem:[%s255] sm:$0xff]
        %275 = vrot.lane.b32.xlu0 %v273, 124
        %v276 = vpop.permute.xlu0 %275
        %278 = vrot.lane.b32.xlu0 %v273, 120
        %v279 = vpop.permute.xlu0 %278
        %281 = vrot.lane.b32.xlu0 %v273, 116
        %v282 = vpop.permute.xlu0 %281
        %v284 = vmul.f32 %v273, 0.5
        %v285 = vmul.f32 %v276, 0.5
        %v286 = vmul.f32 %v279, 0.5
        %v287 = vmul.f32 %v282, 0.5
        %vm288 = vcmask 31744
        %v290 = vsel %vm288, %v284, 0
        %v293 = vsel %vm288, %v285, 0
        %v296 = vsel %vm288, %v286, 0
        %v299 = vsel %vm288, %v287, 0
        %v302 = vsel %vm288, %v271, 0
        %304 = vmatprep.subr.mxu0 0.0
        %305 = vmatpush1.xpose.msra.mxu0 %v302
        %306 = vmatprep.subr.mxu0 0.0
        %307 = vmatpush1.xpose.msra.mxu0 0.0
        %308 = vmatprep.subr.mxu0 0.0
        %309 = vmatpush1.xpose.msra.mxu0 0.0
        %310 = vmatprep.subr.mxu0 0.0
        %311 = vmatpush1.xpose.msra.mxu0 0.0
        %312 = vmatprep.subr.mxu0 0.0
        %313 = vmatpush1.xpose.msra.mxu0 0.0
        %314 = vmatprep.subr.mxu0 0.0
        %315 = vmatpush1.xpose.msra.mxu0 0.0
        %316 = vmatprep.subr.mxu0 0.0
        %317 = vmatpush1.xpose.msra.mxu0 0.0
        %318 = vmatprep.subr.mxu0 0.0
        %319 = vmatpush1.xpose.msra.mxu0 0.0
        %320 = vmatprep.subr.mxu0 0.0
        %321 = vmatpush1.xpose.msra.mxu0 0.0
        %322 = vmatprep.subr.mxu0 0.0
        %323 = vmatpush1.xpose.msra.mxu0 0.0
        %324 = vmatprep.subr.mxu0 0.0
        %325 = vmatpush1.xpose.msra.mxu0 0.0
        %326 = vmatprep.subr.mxu0 0.0
        %327 = vmatpush1.xpose.msra.mxu0 0.0
        %328 = vmatprep.subr.mxu0 0.0
        %329 = vmatpush1.xpose.msra.mxu0 0.0
        %330 = vmatprep.subr.mxu0 0.0
        %331 = vmatpush1.xpose.msra.mxu0 0.0
        %332 = vmatprep.subr.mxu0 0.0
        %333 = vmatpush1.xpose.msra.mxu0 0.0
        %334 = vmatprep.subr.mxu0 0.0
        %335 = vmatpush1.xpose.msra.mxu0 0.0
        %336 = vmatprep.subr.mxu0 0.0
        %337 = vmatpush1.xpose.msra.mxu0 0.0
        %338 = vmatprep.subr.mxu0 0.0
        %339 = vmatpush1.xpose.msra.mxu0 0.0
        %340 = vmatprep.subr.mxu0 0.0
        %341 = vmatpush1.xpose.msra.mxu0 0.0
        %342 = vmatprep.subr.mxu0 0.0
        %343 = vmatpush1.xpose.msra.mxu0 0.0
        %344 = vmatprep.subr.mxu0 0.0
        %345 = vmatpush1.xpose.msra.mxu0 0.0
        %346 = vmatprep.subr.mxu0 0.0
        %347 = vmatpush1.xpose.msra.mxu0 0.0
        %348 = vmatprep.subr.mxu0 0.0
        %349 = vmatpush1.xpose.msra.mxu0 0.0
        %350 = vmatprep.subr.mxu0 0.0
        %351 = vmatpush1.xpose.msra.mxu0 0.0
        %352 = vmatprep.subr.mxu0 0.0
        %353 = vmatpush1.xpose.msra.mxu0 0.0
        %354 = vmatprep.subr.mxu0 0.0
        %355 = vmatpush1.xpose.msra.mxu0 0.0
        %356 = vmatprep.subr.mxu0 0.0
        %357 = vmatpush1.xpose.msra.mxu0 0.0
        %358 = vmatprep.subr.mxu0 0.0
        %359 = vmatpush1.xpose.msra.mxu0 0.0
        %360 = vmatprep.subr.mxu0 0.0
        %361 = vmatpush1.xpose.msra.mxu0 0.0
        %362 = vmatprep.subr.mxu0 0.0
        %363 = vmatpush1.xpose.msra.mxu0 0.0
        %364 = vmatprep.subr.mxu0 0.0
        %365 = vmatpush1.xpose.msra.mxu0 0.0
        %366 = vmatprep.subr.mxu0 0.0
        %367 = vmatpush1.xpose.msra.mxu0 0.0
        %368 = vmatprep.mubr.f32.mxu0 0.0
        %369 = vmatmul.mubr.f32.gmra.mrb[0].mxu0 %v290
        %v370 = vpop.f32.mrb[0].mxu0
        %v371 = vadd.f32 0.0, %v370
        %v372 = vpop.f32.mrb[0].mxu0
        %373 = vmatprep.mubr.f32.mxu0 0.0
        %374 = vmatmul.mubr.f32.gmra.mrb[0].mxu0 %v293
        %v375 = vpop.f32.mrb[0].mxu0
        %v376 = vadd.f32 0.0, %v375
        %v377 = vpop.f32.mrb[0].mxu0
        %378 = vmatprep.mubr.f32.mxu0 0.0
        %379 = vmatmul.mubr.f32.gmra.mrb[0].mxu0 %v296
        %v380 = vpop.f32.mrb[0].mxu0
        %v381 = vadd.f32 0.0, %v380
        %v382 = vpop.f32.mrb[0].mxu0
        %383 = vmatprep.mubr.f32.mxu0 0.0
        %384 = vmatmul.mubr.f32.gmra.mrb[0].mxu0 %v299
        %v385 = vpop.f32.mrb[0].mxu0
        %v386 = vadd.f32 0.0, %v385
        %v387 = vpop.f32.mrb[0].mxu0
        %388 = vdwg.mxu0
        %vm389 = vcmask 64512
        %v390 = vsel %vm389, %v371, -inf
        %391 = vmax.xlane.f32.xlu0 %v390
        %v392 = vpop.xlane.xlu0 %391
        %v393 = vsel %vm389, %v376, -inf
        %394 = vmax.xlane.f32.xlu0 %v393
        %v395 = vpop.xlane.xlu0 %394
        %v396 = vsel %vm389, %v381, -inf
        %397 = vmax.xlane.f32.xlu0 %v396
        %v398 = vpop.xlane.xlu0 %397
        %v399 = vsel %vm389, %v386, -inf
        %400 = vmax.xlane.f32.xlu0 %v399
        %v401 = vpop.xlane.xlu0 %400
        %v402 = vsub.f32 %v371, %v392
        %v403 = vsub.f32 %v376, %v395
        %v404 = vsub.f32 %v381, %v398
        %v405 = vsub.f32 %v386, %v401
        %v406 = vmul.f32 %v402, 1.442695
        %v407 = vpow.pop %v406
        %v408 = vmul.f32 %v403, 1.442695
        %v409 = vpow.pop %v408
        %v410 = vmul.f32 %v404, 1.442695
        %v411 = vpow.pop %v410
        %v412 = vmul.f32 %v405, 1.442695
        %v413 = vpow.pop %v412
        %v414 = vsel %vm389, %v407, 0.0
        %415 = vadd.xlane.f32.xlu0 %v414
        %v416 = vpop.xlane.xlu0 %415
        %v417 = vsel %vm389, %v409, 0.0
        %418 = vadd.xlane.f32.xlu0 %v417
        %v419 = vpop.xlane.xlu0 %418
        %v420 = vsel %vm389, %v411, 0.0
        %421 = vadd.xlane.f32.xlu0 %v420
        %v422 = vpop.xlane.xlu0 %421
        %v423 = vsel %vm389, %v413, 0.0
        %424 = vadd.xlane.f32.xlu0 %v423
        %v425 = vpop.xlane.xlu0 %424
        %v426 = vrcp.pop %v416
        %v427 = vmul.f32 %v407, %v426
        %v428 = vrcp.pop %v419
        %v429 = vmul.f32 %v409, %v428
        %v430 = vrcp.pop %v422
        %v431 = vmul.f32 %v411, %v430
        %v432 = vrcp.pop %v425
        %v433 = vmul.f32 %v413, %v432
        %v435 = vsel %vm389, %v427, 0
        %v438 = vsel %vm389, %v429, 0
        %v441 = vsel %vm389, %v431, 0
        %v444 = vsel %vm389, %v433, 0
        %446 = vmatprep.subr.mxu0 0.0
        %447 = vmatpush1.msra.mxu0 %v272
        %448 = vmatprep.subr.mxu0 0.0
        %449 = vmatpush1.msra.mxu0 0.0
        %450 = vmatprep.subr.mxu0 0.0
        %451 = vmatpush1.msra.mxu0 0.0
        %452 = vmatprep.subr.mxu0 0.0
        %453 = vmatpush1.msra.mxu0 0.0
        %454 = vmatprep.subr.mxu0 0.0
        %455 = vmatpush1.msra.mxu0 0.0
        %456 = vmatprep.subr.mxu0 0.0
        %457 = vmatpush1.msra.mxu0 0.0
        %458 = vmatprep.subr.mxu0 0.0
        %459 = vmatpush1.msra.mxu0 0.0
        %460 = vmatprep.subr.mxu0 0.0
        %461 = vmatpush1.msra.mxu0 0.0
        %462 = vmatprep.subr.mxu0 0.0
        %463 = vmatpush1.msra.mxu0 0.0
        %464 = vmatprep.subr.mxu0 0.0
        %465 = vmatpush1.msra.mxu0 0.0
        %466 = vmatprep.subr.mxu0 0.0
        %467 = vmatpush1.msra.mxu0 0.0
        %468 = vmatprep.subr.mxu0 0.0
        %469 = vmatpush1.msra.mxu0 0.0
        %470 = vmatprep.subr.mxu0 0.0
        %471 = vmatpush1.msra.mxu0 0.0
        %472 = vmatprep.subr.mxu0 0.0
        %473 = vmatpush1.msra.mxu0 0.0
        %474 = vmatprep.subr.mxu0 0.0
        %475 = vmatpush1.msra.mxu0 0.0
        %476 = vmatprep.subr.mxu0 0.0
        %477 = vmatpush1.msra.mxu0 0.0
        %478 = vmatprep.subr.mxu0 0.0
        %479 = vmatpush1.msra.mxu0 0.0
        %480 = vmatprep.subr.mxu0 0.0
        %481 = vmatpush1.msra.mxu0 0.0
        %482 = vmatprep.subr.mxu0 0.0
        %483 = vmatpush1.msra.mxu0 0.0
        %484 = vmatprep.subr.mxu0 0.0
        %485 = vmatpush1.msra.mxu0 0.0
        %486 = vmatprep.subr.mxu0 0.0
        %487 = vmatpush1.msra.mxu0 0.0
        %488 = vmatprep.subr.mxu0 0.0
        %489 = vmatpush1.msra.mxu0 0.0
        %490 = vmatprep.subr.mxu0 0.0
        %491 = vmatpush1.msra.mxu0 0.0
        %492 = vmatprep.subr.mxu0 0.0
        %493 = vmatpush1.msra.mxu0 0.0
        %494 = vmatprep.subr.mxu0 0.0
        %495 = vmatpush1.msra.mxu0 0.0
        %496 = vmatprep.subr.mxu0 0.0
        %497 = vmatpush1.msra.mxu0 0.0
        %498 = vmatprep.subr.mxu0 0.0
        %499 = vmatpush1.msra.mxu0 0.0
        %500 = vmatprep.subr.mxu0 0.0
        %501 = vmatpush1.msra.mxu0 0.0
        %502 = vmatprep.subr.mxu0 0.0
        %503 = vmatpush1.msra.mxu0 0.0
        %504 = vmatprep.subr.mxu0 0.0
        %505 = vmatpush1.msra.mxu0 0.0
        %506 = vmatprep.subr.mxu0 0.0
        %507 = vmatpush1.msra.mxu0 0.0
        %508 = vmatprep.subr.mxu0 0.0
        %509 = vmatpush1.msra.mxu0 0.0
        %510 = vmatprep.mubr.f32.mxu0 0.0
        %511 = vmatmul.mubr.f32.gmra.mrb[0].mxu0 %v435
        %v512 = vpop.f32.mrb[0].mxu0
        %v513 = vadd.f32 0.0, %v512
        %v514 = vpop.f32.mrb[0].mxu0
        %515 = vmatprep.mubr.f32.mxu0 0.0
        %516 = vmatmul.mubr.f32.gmra.mrb[0].mxu0 %v438
        %v517 = vpop.f32.mrb[0].mxu0
        %v518 = vadd.f32 0.0, %v517
        %v519 = vpop.f32.mrb[0].mxu0
        %520 = vmatprep.mubr.f32.mxu0 0.0
        %521 = vmatmul.mubr.f32.gmra.mrb[0].mxu0 %v441
        %v522 = vpop.f32.mrb[0].mxu0
        %v523 = vadd.f32 0.0, %v522
        %v524 = vpop.f32.mrb[0].mxu0
        %525 = vmatprep.mubr.f32.mxu0 0.0
        %526 = vmatmul.mubr.f32.gmra.mrb[0].mxu0 %v444
        %v527 = vpop.f32.mrb[0].mxu0
        %v528 = vadd.f32 0.0, %v527
        %v529 = vpop.f32.mrb[0].mxu0
        %530 = vdwg.mxu0
        %531 = vst.msk [vmem:[%s248] sm:$0xff] %vm389, %v427
        %532 = vst.msk [vmem:[%s270] sm:$0xff] %vm288, %v513
        %s533 = scalar_lea.vmem %s248, 8 [#allocation2]
        %534 = vst.msk [vmem:[%s533] sm:$0xff] %vm389, %v429
        %536 = vrot.lane.b32.xlu0 %v518, 4
        %v537 = vpop.permute.xlu0 %536
        %vm539 = vcmask 64544
        %540 = vst.msk [vmem:[%s270] sm:$0xff] %vm539, %v537
        %s541 = scalar_lea.vmem %s248, 16 [#allocation2]
        %542 = vst.msk [vmem:[%s541] sm:$0xff] %vm389, %v431
        %544 = vrot.lane.b32.xlu0 %v523, 8
        %v545 = vpop.permute.xlu0 %544
        %vm547 = vcmask 97344
        %548 = vst.msk [vmem:[%s270] sm:$0xff] %vm547, %v545
        %s549 = scalar_lea.vmem %s248, 24 [#allocation2]
        %550 = vst.msk [vmem:[%s549] sm:$0xff] %vm389, %v433
        %552 = vrot.lane.b32.xlu0 %v528, 12
        %v553 = vpop.permute.xlu0 %552
        %vm555 = vcmask 130144
        %556 = vst.msk [vmem:[%s270] sm:$0xff] %vm555, %v553
        %v557 = vld [vmem:[%s259] sm:$0xff]
        %v558 = vld [vmem:[%s263] sm:$0xff]
        %v559 = vld [vmem:[%s255] sm:$0xff]
        %561 = vrot.lane.b32.xlu0 %v559, 124
        %v562 = vpop.permute.xlu0 %561
        %564 = vrot.lane.b32.xlu0 %v559, 120
        %v565 = vpop.permute.xlu0 %564
        %567 = vrot.lane.b32.xlu0 %v559, 116
        %v568 = vpop.permute.xlu0 %567
        %v570 = vmul.f32 %v559, 0.5
        %v571 = vmul.f32 %v562, 0.5
        %v572 = vmul.f32 %v565, 0.5
        %v573 = vmul.f32 %v568, 0.5
        %578 = vrot.lane.b32.xlu0 %v570, 112
        %v579 = vpop.permute.xlu0 %578
        %580 = vrot.lane.b32.xlu0 %v571, 112
        %v581 = vpop.permute.xlu0 %580
        %582 = vrot.lane.b32.xlu0 %v572, 112
        %v583 = vpop.permute.xlu0 %582
        %584 = vrot.lane.b32.xlu0 %v573, 112
        %v585 = vpop.permute.xlu0 %584
        %587 = vrot.lane.b32.xlu0 %v557, 124
        %v588 = vpop.permute.xlu0 %587
        %v589 = vsel %vm288, %v579, 0
        %v591 = vsel %vm288, %v581, 0
        %v593 = vsel %vm288, %v583, 0
        %v595 = vsel %vm288, %v585, 0
        %v597 = vsel %vm288, %v588, 0
        %599 = vmatprep.subr.mxu0 0.0
        %600 = vmatpush1.xpose.msra.mxu0 %v597
        %601 = vmatprep.subr.mxu0 0.0
        %602 = vmatpush1.xpose.msra.mxu0 0.0
        %603 = vmatprep.subr.mxu0 0.0
        %604 = vmatpush1.xpose.msra.mxu0 0.0
        %605 = vmatprep.subr.mxu0 0.0
        %606 = vmatpush1.xpose.msra.mxu0 0.0
        %607 = vmatprep.subr.mxu0 0.0
        %608 = vmatpush1.xpose.msra.mxu0 0.0
        %609 = vmatprep.subr.mxu0 0.0
        %610 = vmatpush1.xpose.msra.mxu0 0.0
        %611 = vmatprep.subr.mxu0 0.0
        %612 = vmatpush1.xpose.msra.mxu0 0.0
        %613 = vmatprep.subr.mxu0 0.0
        %614 = vmatpush1.xpose.msra.mxu0 0.0
        %615 = vmatprep.subr.mxu0 0.0
        %616 = vmatpush1.xpose.msra.mxu0 0.0
        %617 = vmatprep.subr.mxu0 0.0
        %618 = vmatpush1.xpose.msra.mxu0 0.0
        %619 = vmatprep.subr.mxu0 0.0
        %620 = vmatpush1.xpose.msra.mxu0 0.0
        %621 = vmatprep.subr.mxu0 0.0
        %622 = vmatpush1.xpose.msra.mxu0 0.0
        %623 = vmatprep.subr.mxu0 0.0
        %624 = vmatpush1.xpose.msra.mxu0 0.0
        %625 = vmatprep.subr.mxu0 0.0
        %626 = vmatpush1.xpose.msra.mxu0 0.0
        %627 = vmatprep.subr.mxu0 0.0
        %628 = vmatpush1.xpose.msra.mxu0 0.0
        %629 = vmatprep.subr.mxu0 0.0
        %630 = vmatpush1.xpose.msra.mxu0 0.0
        %631 = vmatprep.subr.mxu0 0.0
        %632 = vmatpush1.xpose.msra.mxu0 0.0
        %633 = vmatprep.subr.mxu0 0.0
        %634 = vmatpush1.xpose.msra.mxu0 0.0
        %635 = vmatprep.subr.mxu0 0.0
        %636 = vmatpush1.xpose.msra.mxu0 0.0
        %637 = vmatprep.subr.mxu0 0.0
        %638 = vmatpush1.xpose.msra.mxu0 0.0
        %639 = vmatprep.subr.mxu0 0.0
        %640 = vmatpush1.xpose.msra.mxu0 0.0
        %641 = vmatprep.subr.mxu0 0.0
        %642 = vmatpush1.xpose.msra.mxu0 0.0
        %643 = vmatprep.subr.mxu0 0.0
        %644 = vmatpush1.xpose.msra.mxu0 0.0
        %645 = vmatprep.subr.mxu0 0.0
        %646 = vmatpush1.xpose.msra.mxu0 0.0
        %647 = vmatprep.subr.mxu0 0.0
        %648 = vmatpush1.xpose.msra.mxu0 0.0
        %649 = vmatprep.subr.mxu0 0.0
        %650 = vmatpush1.xpose.msra.mxu0 0.0
        %651 = vmatprep.subr.mxu0 0.0
        %652 = vmatpush1.xpose.msra.mxu0 0.0
        %653 = vmatprep.subr.mxu0 0.0
        %654 = vmatpush1.xpose.msra.mxu0 0.0
        %655 = vmatprep.subr.mxu0 0.0
        %656 = vmatpush1.xpose.msra.mxu0 0.0
        %657 = vmatprep.subr.mxu0 0.0
        %658 = vmatpush1.xpose.msra.mxu0 0.0
        %659 = vmatprep.subr.mxu0 0.0
        %660 = vmatpush1.xpose.msra.mxu0 0.0
        %661 = vmatprep.subr.mxu0 0.0
        %662 = vmatpush1.xpose.msra.mxu0 0.0
        %663 = vmatprep.mubr.f32.mxu0 0.0
        %664 = vmatmul.mubr.f32.gmra.mrb[0].mxu0 %v589
        %v665 = vpop.f32.mrb[0].mxu0
        %v666 = vadd.f32 0.0, %v665
        %v667 = vpop.f32.mrb[0].mxu0
        %668 = vmatprep.mubr.f32.mxu0 0.0
        %669 = vmatmul.mubr.f32.gmra.mrb[0].mxu0 %v591
        %v670 = vpop.f32.mrb[0].mxu0
        %v671 = vadd.f32 0.0, %v670
        %v672 = vpop.f32.mrb[0].mxu0
        %673 = vmatprep.mubr.f32.mxu0 0.0
        %674 = vmatmul.mubr.f32.gmra.mrb[0].mxu0 %v593
        %v675 = vpop.f32.mrb[0].mxu0
        %v676 = vadd.f32 0.0, %v675
        %v677 = vpop.f32.mrb[0].mxu0
        %678 = vmatprep.mubr.f32.mxu0 0.0
        %679 = vmatmul.mubr.f32.gmra.mrb[0].mxu0 %v595
        %v680 = vpop.f32.mrb[0].mxu0
        %v681 = vadd.f32 0.0, %v680
        %v682 = vpop.f32.mrb[0].mxu0
        %683 = vdwg.mxu0
        %v684 = vsel %vm389, %v666, -inf
        %685 = vmax.xlane.f32.xlu0 %v684
        %v686 = vpop.xlane.xlu0 %685
        %v687 = vsel %vm389, %v671, -inf
        %688 = vmax.xlane.f32.xlu0 %v687
        %v689 = vpop.xlane.xlu0 %688
        %v690 = vsel %vm389, %v676, -inf
        %691 = vmax.xlane.f32.xlu0 %v690
        %v692 = vpop.xlane.xlu0 %691
        %v693 = vsel %vm389, %v681, -inf
        %694 = vmax.xlane.f32.xlu0 %v693
        %v695 = vpop.xlane.xlu0 %694
        %v696 = vsub.f32 %v666, %v686
        %v697 = vsub.f32 %v671, %v689
        %v698 = vsub.f32 %v676, %v692
        %v699 = vsub.f32 %v681, %v695
        %v700 = vmul.f32 %v696, 1.442695
        %v701 = vpow.pop %v700
        %v702 = vmul.f32 %v697, 1.442695
        %v703 = vpow.pop %v702
        %v704 = vmul.f32 %v698, 1.442695
        %v705 = vpow.pop %v704
        %v706 = vmul.f32 %v699, 1.442695
        %v707 = vpow.pop %v706
        %v708 = vsel %vm389, %v701, 0.0
        %709 = vadd.xlane.f32.xlu0 %v708
        %v710 = vpop.xlane.xlu0 %709
        %v711 = vsel %vm389, %v703, 0.0
        %712 = vadd.xlane.f32.xlu0 %v711
        %v713 = vpop.xlane.xlu0 %712
        %v714 = vsel %vm389, %v705, 0.0
        %715 = vadd.xlane.f32.xlu0 %v714
        %v716 = vpop.xlane.xlu0 %715
        %v717 = vsel %vm389, %v707, 0.0
        %718 = vadd.xlane.f32.xlu0 %v717
        %v719 = vpop.xlane.xlu0 %718
        %v720 = vrcp.pop %v710
        %v721 = vmul.f32 %v701, %v720
        %v722 = vrcp.pop %v713
        %v723 = vmul.f32 %v703, %v722
        %v724 = vrcp.pop %v716
        %v725 = vmul.f32 %v705, %v724
        %v726 = vrcp.pop %v719
        %v727 = vmul.f32 %v707, %v726
        %729 = vrot.lane.b32.xlu0 %v558, 124
        %v730 = vpop.permute.xlu0 %729
        %v733 = vsel %vm389, %v721, 0
        %v736 = vsel %vm389, %v723, 0
        %v739 = vsel %vm389, %v725, 0
        %v742 = vsel %vm389, %v727, 0
        %744 = vmatprep.subr.mxu0 0.0
        %745 = vmatpush1.msra.mxu0 %v730
        %746 = vmatprep.subr.mxu0 0.0
        %747 = vmatpush1.msra.mxu0 0.0
        %748 = vmatprep.subr.mxu0 0.0
        %749 = vmatpush1.msra.mxu0 0.0
        %750 = vmatprep.subr.mxu0 0.0
        %751 = vmatpush1.msra.mxu0 0.0
        %752 = vmatprep.subr.mxu0 0.0
        %753 = vmatpush1.msra.mxu0 0.0
        %754 = vmatprep.subr.mxu0 0.0
        %755 = vmatpush1.msra.mxu0 0.0
        %756 = vmatprep.subr.mxu0 0.0
        %757 = vmatpush1.msra.mxu0 0.0
        %758 = vmatprep.subr.mxu0 0.0
        %759 = vmatpush1.msra.mxu0 0.0
        %760 = vmatprep.subr.mxu0 0.0
        %761 = vmatpush1.msra.mxu0 0.0
        %762 = vmatprep.subr.mxu0 0.0
        %763 = vmatpush1.msra.mxu0 0.0
        %764 = vmatprep.subr.mxu0 0.0
        %765 = vmatpush1.msra.mxu0 0.0
        %766 = vmatprep.subr.mxu0 0.0
        %767 = vmatpush1.msra.mxu0 0.0
        %768 = vmatprep.subr.mxu0 0.0
        %769 = vmatpush1.msra.mxu0 0.0
        %770 = vmatprep.subr.mxu0 0.0
        %771 = vmatpush1.msra.mxu0 0.0
        %772 = vmatprep.subr.mxu0 0.0
        %773 = vmatpush1.msra.mxu0 0.0
        %774 = vmatprep.subr.mxu0 0.0
        %775 = vmatpush1.msra.mxu0 0.0
        %776 = vmatprep.subr.mxu0 0.0
        %777 = vmatpush1.msra.mxu0 0.0
        %778 = vmatprep.subr.mxu0 0.0
        %779 = vmatpush1.msra.mxu0 0.0
        %780 = vmatprep.subr.mxu0 0.0
        %781 = vmatpush1.msra.mxu0 0.0
        %782 = vmatprep.subr.mxu0 0.0
        %783 = vmatpush1.msra.mxu0 0.0
        %784 = vmatprep.subr.mxu0 0.0
        %785 = vmatpush1.msra.mxu0 0.0
        %786 = vmatprep.subr.mxu0 0.0
        %787 = vmatpush1.msra.mxu0 0.0
        %788 = vmatprep.subr.mxu0 0.0
        %789 = vmatpush1.msra.mxu0 0.0
        %790 = vmatprep.subr.mxu0 0.0
        %791 = vmatpush1.msra.mxu0 0.0
        %792 = vmatprep.subr.mxu0 0.0
        %793 = vmatpush1.msra.mxu0 0.0
        %794 = vmatprep.subr.mxu0 0.0
        %795 = vmatpush1.msra.mxu0 0.0
        %796 = vmatprep.subr.mxu0 0.0
        %797 = vmatpush1.msra.mxu0 0.0
        %798 = vmatprep.subr.mxu0 0.0
        %799 = vmatpush1.msra.mxu0 0.0
        %800 = vmatprep.subr.mxu0 0.0
        %801 = vmatpush1.msra.mxu0 0.0
        %802 = vmatprep.subr.mxu0 0.0
        %803 = vmatpush1.msra.mxu0 0.0
        %804 = vmatprep.subr.mxu0 0.0
        %805 = vmatpush1.msra.mxu0 0.0
        %806 = vmatprep.subr.mxu0 0.0
        %807 = vmatpush1.msra.mxu0 0.0
        %808 = vmatprep.mubr.f32.mxu0 0.0
        %809 = vmatmul.mubr.f32.gmra.mrb[0].mxu0 %v733
        %v810 = vpop.f32.mrb[0].mxu0
        %v811 = vadd.f32 0.0, %v810
        %v812 = vpop.f32.mrb[0].mxu0
        %813 = vmatprep.mubr.f32.mxu0 0.0
        %814 = vmatmul.mubr.f32.gmra.mrb[0].mxu0 %v736
        %v815 = vpop.f32.mrb[0].mxu0
        %v816 = vadd.f32 0.0, %v815
        %v817 = vpop.f32.mrb[0].mxu0
        %818 = vmatprep.mubr.f32.mxu0 0.0
        %819 = vmatmul.mubr.f32.gmra.mrb[0].mxu0 %v739
        %v820 = vpop.f32.mrb[0].mxu0
        %v821 = vadd.f32 0.0, %v820
        %v822 = vpop.f32.mrb[0].mxu0
        %823 = vmatprep.mubr.f32.mxu0 0.0
        %824 = vmatmul.mubr.f32.gmra.mrb[0].mxu0 %v742
        %v825 = vpop.f32.mrb[0].mxu0
        %v826 = vadd.f32 0.0, %v825
        %v827 = vpop.f32.mrb[0].mxu0
        %828 = vdwg.mxu0
        %s829 = scalar_lea.vmem %s248, 32 [#allocation2]
        %830 = vst.msk [vmem:[%s829] sm:$0xff] %vm389, %v721
        %832 = vrot.lane.b32.xlu0 %v811, 16
        %v833 = vpop.permute.xlu0 %832
        %vm835 = vcmask 162944
        %836 = vst.msk [vmem:[%s270] sm:$0xff] %vm835, %v833
        %s837 = scalar_lea.vmem %s248, 40 [#allocation2]
        %838 = vst.msk [vmem:[%s837] sm:$0xff] %vm389, %v723
        %840 = vrot.lane.b32.xlu0 %v816, 20
        %v841 = vpop.permute.xlu0 %840
        %vm843 = vcmask 195744
        %844 = vst.msk [vmem:[%s270] sm:$0xff] %vm843, %v841
        %s845 = scalar_lea.vmem %s248, 48 [#allocation2]
        %846 = vst.msk [vmem:[%s845] sm:$0xff] %vm389, %v725
        %848 = vrot.lane.b32.xlu0 %v821, 24
        %v849 = vpop.permute.xlu0 %848
        %vm851 = vcmask 228544
        %852 = vst.msk [vmem:[%s270] sm:$0xff] %vm851, %v849
        %s853 = scalar_lea.vmem %s248, 56 [#allocation2]
        %854 = vst.msk [vmem:[%s853] sm:$0xff] %vm389, %v727
        %856 = vrot.lane.b32.xlu0 %v826, 28
        %v857 = vpop.permute.xlu0 %856
        %vm859 = vcmask 261344
        %860 = vst.msk [vmem:[%s270] sm:$0xff] %vm859, %v857
        %p861 = scmp.lt.s32.totalorder %s23, 1
        %s862 = scalar_select %p861, %s23, 1
        %p863 = scmp.lt.s32.totalorder %s24, 0
        %s864 = scalar_select %p863, %s24, 0
        %s865 = sadd.s32 %s864, %s862
        %s866 = smul.addr %s865, 8
        %s867 = scalar_lea.vmem %s3, %s866
        %s868 = sand.u32 %s149, 1
        %s869 = scalar_lea.sflag [#allocation3], %s868
        %s870 = sand.u32 %s149, 1
        %s871 = smul.addr %s870, 64
        %s872 = scalar_lea.vmem [#allocation2], %s871
        // Predicated region
        $region33: #{gqa_forward.4} parent=31 // pred_check
          %p873 = pneg %p131
        $region34: #{gqa_forward.4} parent=31 // pred_check_branch
          %875 = sbr.rel (%p873) target = $region36
        $region35: #{gqa_forward.4} parent=31 // pred_region
          _
        $region36: #{gqa_forward.4} parent=31 // pred_fallthru
          _
        // Predicated region
        $region37: #{gqa_forward.4} parent=31 // pred_check
          %p876 = pneg %p159
        $region38: #{gqa_forward.4} parent=31 // pred_check_branch
          %878 = sbr.rel (%p876) target = $region40
        $region39: #{gqa_forward.4} parent=31 // pred_region
          %s880 = ssub.s32 1024, 1024
          %881 = vsyncadd %s869, %s880
          %s882 = smul.addr %s23, 8
          %s883 = sadd.s32 %s24, %s882
          %s884 = smul.addr %s883, 128
          %s885 = scalar_lea.hbm %s4, %s884
          %s886 = sshll.u32 %s872, 4
          %s887 = int_to_ptr.vmem [resolvable:$true] %s886
          %892 = dma.vmem_to_hbm [thread:$0]  %s887, 1024, %s885, %s869, 128, 128, 8
        $region40: #{gqa_forward.4} parent=31 // pred_fallthru
          _
      $region32: #{gqa_forward.4} parent=5 // pred_fallthru
        _
      %p893 = scmp.le.s32.totalorder 2, %s14
      // Predicated region
      $region41: #{gqa_forward.4} parent=5 // pred_check
        %p894 = pneg %p893
      $region42: #{gqa_forward.4} parent=5 // pred_check_branch
        %896 = sbr.rel (%p894) target = $region44
      $region43: #{gqa_forward.4} parent=5 // pred_region
        %s897 = ssub.s32 %s14, 2
        // Predicated region
        $region45: #{gqa_forward.4} parent=43 // pred_check
          %p898 = pneg %p137
        $region46: #{gqa_forward.4} parent=43 // pred_check_branch
          %900 = sbr.rel (%p898) target = $region48
        $region47: #{gqa_forward.4} parent=43 // pred_region
          %p901 = scmp.lt.s32.totalorder %s25, 1
          %s902 = scalar_select %p901, %s25, 1
          %p903 = scmp.lt.s32.totalorder %s26, 0
          %s904 = scalar_select %p903, %s26, 0
          %s905 = sadd.s32 %s904, %s902
          %s906 = smul.addr %s905, 8
          %s907 = scalar_lea.vmem %s3, %s906
        $region48: #{gqa_forward.4} parent=43 // pred_fallthru
          _
        // Predicated region
        $region49: #{gqa_forward.4} parent=43 // pred_check
          %p908 = pneg %p165
        $region50: #{gqa_forward.4} parent=43 // pred_check_branch
          %910 = sbr.rel (%p908) target = $region52
        $region51: #{gqa_forward.4} parent=43 // pred_region
          %s911 = sand.u32 %s150, 1
          %s912 = scalar_lea.sflag [#allocation3], %s911
          %s913 = sand.u32 %s150, 1
          %s914 = smul.addr %s913, 64
          %s915 = scalar_lea.vmem [#allocation2], %s914
          %916 = dma.done %s912, 1024
        $region52: #{gqa_forward.4} parent=43 // pred_fallthru
          _
      $region44: #{gqa_forward.4} parent=5 // pred_fallthru
        _
    $region6: #{gqa_forward.4} parent=1 // loop_footer
      %s18 = sadd.s32 1, %s14
    $region7: #{gqa_forward.4} parent=1 // loop_footer_branch
      %13 = sbr.rel target = $region3
    $region8: #{gqa_forward.4} parent=1 // loop_exit
      _
    %917 = vsyncpa [#allocation3], 1
    %s918 = scalar_lea.sflag [#allocation3], 1
    %919 = vsyncpa %s918, 1

</llo_original>
